<compile_context>
chip_gen: v7x
topology: tpu7x:2x2x1
jax: 0.10.0
libtpu: 0.0.40
codegen_flags: <defaults>
</compile_context>

<pallas_src>
import functools
import jax
import jax.numpy as jnp
from jax.experimental import pallas as pl
from jax.experimental.pallas import tpu as pltpu


def _layernorm(h, g, b, eps=1e-5):
    # h: (rows, D) f32 ; g, b: (D,)
    mean = jnp.mean(h, axis=-1, keepdims=True)
    cent = h - mean
    var = jnp.mean(cent * cent, axis=-1, keepdims=True)
    return cent * jax.lax.rsqrt(var + eps) * g + b


def _preln_kernel(x_ref, ln1g, ln1b, wq, wk, wv, wo, bo,
                  ln2g, ln2b, w1, b1, w2, b2, o_ref,
                  *, heads, dim_head, mu):
    bt, n, d = x_ref.shape
    grp = bt * heads                      # (batch, head) group axis
    scale = dim_head ** (-0.5)
    cdt = wq.dtype                        # MXU input dtype (f32 or bf16)

    x = x_ref[...].astype(jnp.float32).reshape(bt * n, d)       # (Bt*N, D)

    # ---------------- Attention branch: attn(ln1(x)) + mu * x ----------------
    h = _layernorm(x, ln1g[0], ln1b[0])                         # (Bt*N, D) f32

    # Head-batched layout: g = b*heads + h. Activations broadcast across heads,
    # per-head weight slabs broadcast across batch -> 3-D batched einsums only
    # (no lane slicing, no concat).
    hg = jnp.broadcast_to(h.reshape(bt, 1, n, d),
                          (bt, heads, n, d)).reshape(grp, n, d).astype(cdt)
    wq_g = jnp.broadcast_to(wq[...][None],
                            (bt, heads, d, dim_head)).reshape(grp, d, dim_head)
    wk_g = jnp.broadcast_to(wk[...][None],
                            (bt, heads, d, dim_head)).reshape(grp, d, dim_head)
    wv_g = jnp.broadcast_to(wv[...][None],
                            (bt, heads, d, dim_head)).reshape(grp, d, dim_head)
    wo_g = jnp.broadcast_to(wo[...][None],
                            (bt, heads, dim_head, d)).reshape(grp, dim_head, d)

    q = jnp.einsum('gnd,gde->gne', hg, wq_g,
                   preferred_element_type=jnp.float32)          # (G, N, dh)
    k = jnp.einsum('gnd,gde->gne', hg, wk_g,
                   preferred_element_type=jnp.float32)
    v = jnp.einsum('gnd,gde->gne', hg, wv_g,
                   preferred_element_type=jnp.float32)

    dots = jnp.einsum('gne,gme->gnm', q.astype(cdt), k.astype(cdt),
                      preferred_element_type=jnp.float32) * scale   # (G, N, N)
    dots = dots - jnp.max(dots, axis=-1, keepdims=True)
    e = jnp.exp(dots)
    attn = e * pl.reciprocal(jnp.sum(e, axis=-1, keepdims=True), approx=True)

    ctx = jnp.einsum('gnm,gme->gne', attn.astype(cdt), v.astype(cdt),
                     preferred_element_type=jnp.float32)        # (G, N, dh)

    # Per-head output projection, then sum over heads (== concat @ w_out).
    proj = jnp.einsum('gne,ged->gnd', ctx.astype(cdt), wo_g,
                      preferred_element_type=jnp.float32)       # (G, N, D)
    proj = jnp.sum(proj.reshape(bt, heads, n, d), axis=1).reshape(bt * n, d)

    x1 = proj + bo[0] + mu * x                                  # (Bt*N, D) f32

    # ---------------- MLP branch: mlp(ln2(x1)) + mu * x1 ----------------
    h2 = _layernorm(x1, ln2g[0], ln2b[0]).astype(cdt)
    ff = jnp.dot(h2, w1[...], preferred_element_type=jnp.float32) + b1[0]
    ff = jnp.maximum(ff, 0.0).astype(cdt)                       # ReLU
    ff = jnp.dot(ff, w2[...], preferred_element_type=jnp.float32) + b2[0]

    out = ff + mu * x1
    o_ref[...] = out.reshape(bt, n, d).astype(o_ref.dtype)


def preln_block(x, params, *, heads, dim_head, mu, block_b=None,
                compute_dtype=jnp.float32):
    B, N, D = x.shape
    inner = heads * dim_head
    hidden = params["w1"].shape[-1]

    if block_b is None:
        # Fold batch so each step sees ~128 matmul rows, but keep >= 2
        # "parallel" grid steps when possible (v7x has 2 TensorCores).
        target = max(1, 128 // max(N, 1))
        block_b = min(B, target)
        if B // block_b < 2 and B >= 2:
            block_b = max(1, B // 2)
        while B % block_b:
            block_b -= 1
    grid_b = B // block_b

    # ---- host-side weight relayout (free): per-head QKV / out-proj slabs ----
    w_qkv = params["w_qkv"]                                     # (D, 3*inner)
    wq = w_qkv[:, :inner].reshape(D, heads, dim_head).transpose(1, 0, 2)
    wk = w_qkv[:, inner:2 * inner].reshape(D, heads, dim_head).transpose(1, 0, 2)
    wv = w_qkv[:, 2 * inner:].reshape(D, heads, dim_head).transpose(1, 0, 2)
    wo = params["w_out"].reshape(heads, dim_head, D)            # (H, dh, D)

    mm_dt = compute_dtype                                       # MXU input dtype
    weights = [
        params["ln1_g"], params["ln1_b"],
        wq.astype(mm_dt), wk.astype(mm_dt), wv.astype(mm_dt), wo.astype(mm_dt),
        params["b_out"],
        params["ln2_g"], params["ln2_b"],
        params["w1"].astype(mm_dt), params["b1"],
        params["w2"].astype(mm_dt), params["b2"],
    ]

    def full_spec(w):
        nd = w.ndim
        return pl.BlockSpec(w.shape, lambda b, _nd=nd: (0,) * _nd)

    in_specs = [pl.BlockSpec((block_b, N, D), lambda b: (b, 0, 0))] + \
               [full_spec(w) for w in weights]

    kernel = functools.partial(_preln_kernel, heads=heads,
                               dim_head=dim_head, mu=mu)

    # Advisory cost estimate so XLA can schedule around the custom call.
    matmul_flops = 2 * B * N * (D * 3 * inner             # QKV projection
                                + 2 * heads * N * dim_head  # dots + attn@v
                                + inner * D                # output projection
                                + 2 * D * hidden)          # MLP
    bytes_acc = 4 * (2 * B * N * D) + sum(
        int(w.size) * w.dtype.itemsize for w in weights)
    cost = pl.CostEstimate(flops=matmul_flops,
                           transcendentals=B * heads * N * N + 2 * B * N,
                           bytes_accessed=bytes_acc)

    return pl.pallas_call(
        kernel,
        out_shape=jax.ShapeDtypeStruct((B, N, D), x.dtype),
        grid_spec=pltpu.PrefetchScalarGridSpec(
            num_scalar_prefetch=0,
            grid=(grid_b,),
            in_specs=in_specs,
            out_specs=pl.BlockSpec((block_b, N, D), lambda b: (b, 0, 0)),
        ),
        compiler_params=pltpu.CompilerParams(
            dimension_semantics=("parallel",)),
        cost_estimate=cost,
    )(x, *weights)


def _reference(x, params, *, heads, dim_head, mu):
    """Pure-JAX reference for sanity checking."""
    inner = heads * dim_head
    scale = dim_head ** (-0.5)

    def ln(h, g, b):
        mean = jnp.mean(h, axis=-1, keepdims=True)
        var = jnp.mean((h - mean) ** 2, axis=-1, keepdims=True)
        return (h - mean) / jnp.sqrt(var + 1e-5) * g[0] + b[0]

    B, N, D = x.shape
    h = ln(x, params["ln1_g"], params["ln1_b"])
    qkv = h @ params["w_qkv"]
    q, k, v = jnp.split(qkv, 3, axis=-1)
    q = q.reshape(B, N, heads, dim_head).transpose(0, 2, 1, 3)
    k = k.reshape(B, N, heads, dim_head).transpose(0, 2, 1, 3)
    v = v.reshape(B, N, heads, dim_head).transpose(0, 2, 1, 3)
    dots = jnp.einsum("bhnd,bhmd->bhnm", q, k) * scale
    attn = jax.nn.softmax(dots, axis=-1)
    out = jnp.einsum("bhnm,bhmd->bhnd", attn, v)
    out = out.transpose(0, 2, 1, 3).reshape(B, N, inner)
    x1 = out @ params["w_out"] + params["b_out"][0] + mu * x
    h2 = ln(x1, params["ln2_g"], params["ln2_b"])
    ff = jax.nn.relu(h2 @ params["w1"] + params["b1"][0]) @ params["w2"] + params["b2"][0]
    return ff + mu * x1


if __name__ == "__main__":
    # small shapes consistent with the module
    B, N, D = 2, 8, 32
    HEADS, DIM_HEAD, HIDDEN = 4, 8, 64
    MU = 0.5
    INNER = HEADS * DIM_HEAD

    key = jax.random.PRNGKey(0)
    keys = jax.random.split(key, 8)

    x = jax.random.normal(keys[0], (B, N, D), jnp.float32)

    params = {
        # LayerNorm params: PyTorch default init (weight=1, bias=0), kept as (1, D)
        "ln1_g": jnp.ones((1, D), jnp.float32),
        "ln1_b": jnp.zeros((1, D), jnp.float32),
        "ln2_g": jnp.ones((1, D), jnp.float32),
        "ln2_b": jnp.zeros((1, D), jnp.float32),
        # Attention weights
        "w_qkv": 0.1 * jax.random.normal(keys[1], (D, 3 * INNER), jnp.float32),
        "w_out": 0.1 * jax.random.normal(keys[2], (INNER, D), jnp.float32),
        "b_out": 0.1 * jax.random.normal(keys[3], (1, D), jnp.float32),
        # FeedForward weights
        "w1": 0.1 * jax.random.normal(keys[4], (D, HIDDEN), jnp.float32),
        "b1": 0.1 * jax.random.normal(keys[5], (1, HIDDEN), jnp.float32),
        "w2": 0.1 * jax.random.normal(keys[6], (HIDDEN, D), jnp.float32),
        "b2": 0.1 * jax.random.normal(keys[7], (1, D), jnp.float32),
    }

    ref = _reference(x, params, heads=HEADS, dim_head=DIM_HEAD, mu=MU)

    # f32 MXU path (strict correctness check; approx softmax reciprocal).
    out = preln_block(x, params, heads=HEADS, dim_head=DIM_HEAD, mu=MU)
    out = jax.block_until_ready(out)
    assert out.shape == (B, N, D)
    assert jnp.allclose(out, ref, atol=5e-3, rtol=5e-3), "f32 mismatch vs reference"

    # bf16 MXU inputs / f32 accumulation (throughput path on v5e/v6e/v7x).
    out_bf16 = preln_block(x, params, heads=HEADS, dim_head=DIM_HEAD, mu=MU,
                           compute_dtype=jnp.bfloat16)
    out_bf16 = jax.block_until_ready(out_bf16)
    assert jnp.allclose(out_bf16, ref, atol=5e-2, rtol=5e-2), "bf16 mismatch vs reference"

    print("KERNEL_OK")
</pallas_src>

<mosaic_0001>
module attributes {stable_mosaic.version = 11 : i64} {
  func.func @_preln_kernel(%arg0: i32, %arg1: memref<1x8x32xf32, #tpu.memory_space<vmem>>, %arg2: memref<1x32xf32, #tpu.memory_space<vmem>>, %arg3: memref<1x32xf32, #tpu.memory_space<vmem>>, %arg4: memref<4x32x8xf32, #tpu.memory_space<vmem>>, %arg5: memref<4x32x8xf32, #tpu.memory_space<vmem>>, %arg6: memref<4x32x8xf32, #tpu.memory_space<vmem>>, %arg7: memref<4x8x32xf32, #tpu.memory_space<vmem>>, %arg8: memref<1x32xf32, #tpu.memory_space<vmem>>, %arg9: memref<1x32xf32, #tpu.memory_space<vmem>>, %arg10: memref<1x32xf32, #tpu.memory_space<vmem>>, %arg11: memref<32x64xf32, #tpu.memory_space<vmem>>, %arg12: memref<1x64xf32, #tpu.memory_space<vmem>>, %arg13: memref<64x32xf32, #tpu.memory_space<vmem>>, %arg14: memref<1x32xf32, #tpu.memory_space<vmem>>, %arg15: memref<1x8x32xf32, #tpu.memory_space<vmem>>) attributes {dimension_semantics = [#tpu.dimension_semantics<parallel>], iteration_bounds = array<i64: 2>, scalar_prefetch = 0 : i64, scratch_operands = 0 : i64, tpu.core_type = #tpu.core_type<tc>, window_params = [{transform_indices = @transform_0, window_bounds = array<i64: 1, 8, 32>}, {pipeline_mode = #tpu.pipeline_mode<synchronous>, transform_indices = @transform_1, window_bounds = array<i64: 1, 32>}, {pipeline_mode = #tpu.pipeline_mode<synchronous>, transform_indices = @transform_2, window_bounds = array<i64: 1, 32>}, {pipeline_mode = #tpu.pipeline_mode<synchronous>, transform_indices = @transform_3, window_bounds = array<i64: 4, 32, 8>}, {pipeline_mode = #tpu.pipeline_mode<synchronous>, transform_indices = @transform_4, window_bounds = array<i64: 4, 32, 8>}, {pipeline_mode = #tpu.pipeline_mode<synchronous>, transform_indices = @transform_5, window_bounds = array<i64: 4, 32, 8>}, {pipeline_mode = #tpu.pipeline_mode<synchronous>, transform_indices = @transform_6, window_bounds = array<i64: 4, 8, 32>}, {pipeline_mode = #tpu.pipeline_mode<synchronous>, transform_indices = @transform_7, window_bounds = array<i64: 1, 32>}, {pipeline_mode = #tpu.pipeline_mode<synchronous>, transform_indices = @transform_8, window_bounds = array<i64: 1, 32>}, {pipeline_mode = #tpu.pipeline_mode<synchronous>, transform_indices = @transform_9, window_bounds = array<i64: 1, 32>}, {pipeline_mode = #tpu.pipeline_mode<synchronous>, transform_indices = @transform_10, window_bounds = array<i64: 32, 64>}, {pipeline_mode = #tpu.pipeline_mode<synchronous>, transform_indices = @transform_11, window_bounds = array<i64: 1, 64>}, {pipeline_mode = #tpu.pipeline_mode<synchronous>, transform_indices = @transform_12, window_bounds = array<i64: 64, 32>}, {pipeline_mode = #tpu.pipeline_mode<synchronous>, transform_indices = @transform_13, window_bounds = array<i64: 1, 32>}, {transform_indices = @transform_14, window_bounds = array<i64: 1, 8, 32>}]} {
    %c0 = arith.constant 0 : index
    %c0_0 = arith.constant 0 : index
    %c0_1 = arith.constant 0 : index
    %0 = vector.load %arg1[%c0, %c0_0, %c0_1] : memref<1x8x32xf32, #tpu.memory_space<vmem>>, vector<1x8x32xf32>
    %1 = vector.shape_cast %0 : vector<1x8x32xf32> to vector<8x32xf32>
    %c0_2 = arith.constant 0 : index
    %c0_3 = arith.constant 0 : index
    %2 = vector.load %arg2[%c0_2, %c0_3] : memref<1x32xf32, #tpu.memory_space<vmem>>, vector<1x32xf32>
    %3 = vector.shape_cast %2 : vector<1x32xf32> to vector<32xf32>
    %c0_4 = arith.constant 0 : index
    %c0_5 = arith.constant 0 : index
    %4 = vector.load %arg3[%c0_4, %c0_5] : memref<1x32xf32, #tpu.memory_space<vmem>>, vector<1x32xf32>
    %5 = vector.shape_cast %4 : vector<1x32xf32> to vector<32xf32>
    %cst = arith.constant dense<0.000000e+00> : vector<8xf32>
    %6 = vector.multi_reduction <add>, %1, %cst [1] : vector<8x32xf32> to vector<8xf32>
    %7 = vector.shape_cast %6 : vector<8xf32> to vector<8x1xf32>
    %cst_6 = arith.constant 3.200000e+01 : f32
    %8 = vector.broadcast %cst_6 : f32 to vector<8x1xf32>
    %9 = arith.divf %7, %8 : vector<8x1xf32>
    %10 = vector.broadcast %9 : vector<8x1xf32> to vector<8x32xf32>
    %11 = arith.subf %1, %10 : vector<8x32xf32>
    %12 = arith.mulf %11, %11 : vector<8x32xf32>
    %cst_7 = arith.constant dense<0.000000e+00> : vector<8xf32>
    %13 = vector.multi_reduction <add>, %12, %cst_7 [1] : vector<8x32xf32> to vector<8xf32>
    %14 = vector.shape_cast %13 : vector<8xf32> to vector<8x1xf32>
    %cst_8 = arith.constant 3.200000e+01 : f32
    %15 = vector.broadcast %cst_8 : f32 to vector<8x1xf32>
    %16 = arith.divf %14, %15 : vector<8x1xf32>
    %cst_9 = arith.constant 9.99999974E-6 : f32
    %17 = vector.broadcast %cst_9 : f32 to vector<8x1xf32>
    %18 = arith.addf %16, %17 : vector<8x1xf32>
    %19 = math.rsqrt %18 : vector<8x1xf32>
    %20 = vector.broadcast %19 : vector<8x1xf32> to vector<8x32xf32>
    %21 = arith.mulf %11, %20 : vector<8x32xf32>
    %22 = vector.shape_cast %3 : vector<32xf32> to vector<1x32xf32>
    %23 = vector.broadcast %22 : vector<1x32xf32> to vector<8x32xf32>
    %24 = arith.mulf %21, %23 : vector<8x32xf32>
    %25 = vector.shape_cast %5 : vector<32xf32> to vector<1x32xf32>
    %26 = vector.broadcast %25 : vector<1x32xf32> to vector<8x32xf32>
    %27 = arith.addf %24, %26 : vector<8x32xf32>
    %28 = vector.shape_cast %27 : vector<8x32xf32> to vector<1x1x8x32xf32>
    %29 = vector.shape_cast %28 : vector<1x1x8x32xf32> to vector<1x1x8x32xf32>
    %30 = vector.broadcast %29 : vector<1x1x8x32xf32> to vector<1x4x8x32xf32>
    %31 = vector.shape_cast %30 : vector<1x4x8x32xf32> to vector<4x8x32xf32>
    %c0_10 = arith.constant 0 : index
    %c0_11 = arith.constant 0 : index
    %c0_12 = arith.constant 0 : index
    %32 = vector.load %arg4[%c0_10, %c0_11, %c0_12] : memref<4x32x8xf32, #tpu.memory_space<vmem>>, vector<4x32x8xf32>
    %33 = vector.shape_cast %32 : vector<4x32x8xf32> to vector<1x4x32x8xf32>
    %34 = vector.shape_cast %33 : vector<1x4x32x8xf32> to vector<4x32x8xf32>
    %c0_13 = arith.constant 0 : index
    %c0_14 = arith.constant 0 : index
    %c0_15 = arith.constant 0 : index
    %35 = vector.load %arg5[%c0_13, %c0_14, %c0_15] : memref<4x32x8xf32, #tpu.memory_space<vmem>>, vector<4x32x8xf32>
    %36 = vector.shape_cast %35 : vector<4x32x8xf32> to vector<1x4x32x8xf32>
    %37 = vector.shape_cast %36 : vector<1x4x32x8xf32> to vector<4x32x8xf32>
    %c0_16 = arith.constant 0 : index
    %c0_17 = arith.constant 0 : index
    %c0_18 = arith.constant 0 : index
    %38 = vector.load %arg6[%c0_16, %c0_17, %c0_18] : memref<4x32x8xf32, #tpu.memory_space<vmem>>, vector<4x32x8xf32>
    %39 = vector.shape_cast %38 : vector<4x32x8xf32> to vector<1x4x32x8xf32>
    %40 = vector.shape_cast %39 : vector<1x4x32x8xf32> to vector<4x32x8xf32>
    %c0_19 = arith.constant 0 : index
    %c0_20 = arith.constant 0 : index
    %c0_21 = arith.constant 0 : index
    %41 = vector.load %arg7[%c0_19, %c0_20, %c0_21] : memref<4x8x32xf32, #tpu.memory_space<vmem>>, vector<4x8x32xf32>
    %42 = vector.shape_cast %41 : vector<4x8x32xf32> to vector<1x4x8x32xf32>
    %43 = vector.shape_cast %42 : vector<1x4x8x32xf32> to vector<4x8x32xf32>
    "tpu.trace_start"() <{level = 10 : i32, message = "gnd,gde->gne"}> : () -> ()
    %cst_22 = arith.constant dense<0.000000e+00> : vector<4x8x8xf32>
    %44 = tpu.matmul %31, %34, %cst_22 {dimension_numbers = #tpu.dot_dimension_numbers<[2], [1], [1], [2], [0, 0, 0, 1, 1, 2], [0], [0]>} : vector<4x8x32xf32>, vector<4x32x8xf32>, vector<4x8x8xf32> -> vector<4x8x8xf32>
    %cst_23 = arith.constant dense<0.000000e+00> : vector<4x8x8xf32>
    %45 = tpu.matmul %31, %37, %cst_23 {dimension_numbers = #tpu.dot_dimension_numbers<[2], [1], [1], [2], [0, 0, 0, 1, 1, 2], [0], [0]>} : vector<4x8x32xf32>, vector<4x32x8xf32>, vector<4x8x8xf32> -> vector<4x8x8xf32>
    %cst_24 = arith.constant dense<0.000000e+00> : vector<4x8x8xf32>
    %46 = tpu.matmul %31, %40, %cst_24 {dimension_numbers = #tpu.dot_dimension_numbers<[2], [1], [1], [2], [0, 0, 0, 1, 1, 2], [0], [0]>} : vector<4x8x32xf32>, vector<4x32x8xf32>, vector<4x8x8xf32> -> vector<4x8x8xf32>
    "tpu.trace_stop"() : () -> ()
    "tpu.trace_start"() <{level = 10 : i32, message = "gne,gme->gnm"}> : () -> ()
    %cst_25 = arith.constant dense<0.000000e+00> : vector<4x8x8xf32>
    %47 = tpu.matmul %44, %45, %cst_25 {dimension_numbers = #tpu.dot_dimension_numbers<[2], [2], [1], [1], [0, 0, 0, 1, 1, 1], [0], [0]>} : vector<4x8x8xf32>, vector<4x8x8xf32>, vector<4x8x8xf32> -> vector<4x8x8xf32>
    "tpu.trace_stop"() : () -> ()
    %cst_26 = arith.constant 0.353553385 : f32
    %48 = vector.broadcast %cst_26 : f32 to vector<4x8x8xf32>
    %49 = arith.mulf %47, %48 : vector<4x8x8xf32>
    %cst_27 = arith.constant dense<0xFF800000> : vector<4x8xf32>
    %50 = vector.multi_reduction <maximumf>, %49, %cst_27 [2] : vector<4x8x8xf32> to vector<4x8xf32>
    %51 = vector.shape_cast %50 : vector<4x8xf32> to vector<4x8x1xf32>
    %52 = vector.broadcast %51 : vector<4x8x1xf32> to vector<4x8x8xf32>
    %53 = arith.subf %49, %52 : vector<4x8x8xf32>
    %54 = math.exp %53 : vector<4x8x8xf32>
    %cst_28 = arith.constant dense<0.000000e+00> : vector<4x8xf32>
    %55 = vector.multi_reduction <add>, %54, %cst_28 [2] : vector<4x8x8xf32> to vector<4x8xf32>
    %56 = vector.shape_cast %55 : vector<4x8xf32> to vector<4x8x1xf32>
    %57 = tpu.reciprocal %56 {approx = true} : vector<4x8x1xf32> -> vector<4x8x1xf32>
    %58 = vector.broadcast %57 : vector<4x8x1xf32> to vector<4x8x8xf32>
    %59 = arith.mulf %54, %58 : vector<4x8x8xf32>
    "tpu.trace_start"() <{level = 10 : i32, message = "gnm,gme->gne"}> : () -> ()
    %cst_29 = arith.constant dense<0.000000e+00> : vector<4x8x8xf32>
    %60 = tpu.matmul %59, %46, %cst_29 {dimension_numbers = #tpu.dot_dimension_numbers<[2], [1], [1], [2], [0, 0, 0, 1, 1, 2], [0], [0]>} : vector<4x8x8xf32>, vector<4x8x8xf32>, vector<4x8x8xf32> -> vector<4x8x8xf32>
    "tpu.trace_stop"() : () -> ()
    "tpu.trace_start"() <{level = 10 : i32, message = "gne,ged->gnd"}> : () -> ()
    %cst_30 = arith.constant dense<0.000000e+00> : vector<4x8x32xf32>
    %61 = tpu.matmul %60, %43, %cst_30 {dimension_numbers = #tpu.dot_dimension_numbers<[2], [1], [1], [2], [0, 0, 0, 1, 1, 2], [0], [0]>} : vector<4x8x8xf32>, vector<4x8x32xf32>, vector<4x8x32xf32> -> vector<4x8x32xf32>
    "tpu.trace_stop"() : () -> ()
    %62 = vector.shape_cast %61 : vector<4x8x32xf32> to vector<1x4x8x32xf32>
    %cst_31 = arith.constant dense<0.000000e+00> : vector<1x8x32xf32>
    %63 = vector.multi_reduction <add>, %62, %cst_31 [1] : vector<1x4x8x32xf32> to vector<1x8x32xf32>
    %64 = vector.shape_cast %63 : vector<1x8x32xf32> to vector<8x32xf32>
    %c0_32 = arith.constant 0 : index
    %c0_33 = arith.constant 0 : index
    %65 = vector.load %arg8[%c0_32, %c0_33] : memref<1x32xf32, #tpu.memory_space<vmem>>, vector<1x32xf32>
    %66 = vector.shape_cast %65 : vector<1x32xf32> to vector<32xf32>
    %67 = vector.shape_cast %66 : vector<32xf32> to vector<1x32xf32>
    %68 = vector.broadcast %67 : vector<1x32xf32> to vector<8x32xf32>
    %69 = arith.addf %64, %68 : vector<8x32xf32>
    %cst_34 = arith.constant 5.000000e-01 : f32
    %70 = vector.broadcast %cst_34 : f32 to vector<8x32xf32>
    %71 = arith.mulf %70, %1 : vector<8x32xf32>
    %72 = arith.addf %69, %71 : vector<8x32xf32>
    %c0_35 = arith.constant 0 : index
    %c0_36 = arith.constant 0 : index
    %73 = vector.load %arg9[%c0_35, %c0_36] : memref<1x32xf32, #tpu.memory_space<vmem>>, vector<1x32xf32>
    %74 = vector.shape_cast %73 : vector<1x32xf32> to vector<32xf32>
    %c0_37 = arith.constant 0 : index
    %c0_38 = arith.constant 0 : index
    %75 = vector.load %arg10[%c0_37, %c0_38] : memref<1x32xf32, #tpu.memory_space<vmem>>, vector<1x32xf32>
    %76 = vector.shape_cast %75 : vector<1x32xf32> to vector<32xf32>
    %cst_39 = arith.constant dense<0.000000e+00> : vector<8xf32>
    %77 = vector.multi_reduction <add>, %72, %cst_39 [1] : vector<8x32xf32> to vector<8xf32>
    %78 = vector.shape_cast %77 : vector<8xf32> to vector<8x1xf32>
    %cst_40 = arith.constant 3.200000e+01 : f32
    %79 = vector.broadcast %cst_40 : f32 to vector<8x1xf32>
    %80 = arith.divf %78, %79 : vector<8x1xf32>
    %81 = vector.broadcast %80 : vector<8x1xf32> to vector<8x32xf32>
    %82 = arith.subf %72, %81 : vector<8x32xf32>
    %83 = arith.mulf %82, %82 : vector<8x32xf32>
    %cst_41 = arith.constant dense<0.000000e+00> : vector<8xf32>
    %84 = vector.multi_reduction <add>, %83, %cst_41 [1] : vector<8x32xf32> to vector<8xf32>
    %85 = vector.shape_cast %84 : vector<8xf32> to vector<8x1xf32>
    %cst_42 = arith.constant 3.200000e+01 : f32
    %86 = vector.broadcast %cst_42 : f32 to vector<8x1xf32>
    %87 = arith.divf %85, %86 : vector<8x1xf32>
    %cst_43 = arith.constant 9.99999974E-6 : f32
    %88 = vector.broadcast %cst_43 : f32 to vector<8x1xf32>
    %89 = arith.addf %87, %88 : vector<8x1xf32>
    %90 = math.rsqrt %89 : vector<8x1xf32>
    %91 = vector.broadcast %90 : vector<8x1xf32> to vector<8x32xf32>
    %92 = arith.mulf %82, %91 : vector<8x32xf32>
    %93 = vector.shape_cast %74 : vector<32xf32> to vector<1x32xf32>
    %94 = vector.broadcast %93 : vector<1x32xf32> to vector<8x32xf32>
    %95 = arith.mulf %92, %94 : vector<8x32xf32>
    %96 = vector.shape_cast %76 : vector<32xf32> to vector<1x32xf32>
    %97 = vector.broadcast %96 : vector<1x32xf32> to vector<8x32xf32>
    %98 = arith.addf %95, %97 : vector<8x32xf32>
    %c0_44 = arith.constant 0 : index
    %c0_45 = arith.constant 0 : index
    %99 = vector.load %arg11[%c0_44, %c0_45] : memref<32x64xf32, #tpu.memory_space<vmem>>, vector<32x64xf32>
    %cst_46 = arith.constant dense<0.000000e+00> : vector<8x64xf32>
    %100 = tpu.matmul %98, %99, %cst_46 {dimension_numbers = #tpu.dot_dimension_numbers<[1], [0], [0], [1], [0, 0, 1, 1], [], []>} : vector<8x32xf32>, vector<32x64xf32>, vector<8x64xf32> -> vector<8x64xf32>
    %c0_47 = arith.constant 0 : index
    %c0_48 = arith.constant 0 : index
    %101 = vector.load %arg12[%c0_47, %c0_48] : memref<1x64xf32, #tpu.memory_space<vmem>>, vector<1x64xf32>
    %102 = vector.shape_cast %101 : vector<1x64xf32> to vector<64xf32>
    %103 = vector.shape_cast %102 : vector<64xf32> to vector<1x64xf32>
    %104 = vector.broadcast %103 : vector<1x64xf32> to vector<8x64xf32>
    %105 = arith.addf %100, %104 : vector<8x64xf32>
    %cst_49 = arith.constant 0.000000e+00 : f32
    %106 = vector.broadcast %cst_49 : f32 to vector<8x64xf32>
    %107 = arith.maximumf %105, %106 : vector<8x64xf32>
    %c0_50 = arith.constant 0 : index
    %c0_51 = arith.constant 0 : index
    %108 = vector.load %arg13[%c0_50, %c0_51] : memref<64x32xf32, #tpu.memory_space<vmem>>, vector<64x32xf32>
    %cst_52 = arith.constant dense<0.000000e+00> : vector<8x32xf32>
    %109 = tpu.matmul %107, %108, %cst_52 {dimension_numbers = #tpu.dot_dimension_numbers<[1], [0], [0], [1], [0, 0, 1, 1], [], []>} : vector<8x64xf32>, vector<64x32xf32>, vector<8x32xf32> -> vector<8x32xf32>
    %c0_53 = arith.constant 0 : index
    %c0_54 = arith.constant 0 : index
    %110 = vector.load %arg14[%c0_53, %c0_54] : memref<1x32xf32, #tpu.memory_space<vmem>>, vector<1x32xf32>
    %111 = vector.shape_cast %110 : vector<1x32xf32> to vector<32xf32>
    %112 = vector.shape_cast %111 : vector<32xf32> to vector<1x32xf32>
    %113 = vector.broadcast %112 : vector<1x32xf32> to vector<8x32xf32>
    %114 = arith.addf %109, %113 : vector<8x32xf32>
    %cst_55 = arith.constant 5.000000e-01 : f32
    %115 = vector.broadcast %cst_55 : f32 to vector<8x32xf32>
    %116 = arith.mulf %115, %72 : vector<8x32xf32>
    %117 = arith.addf %114, %116 : vector<8x32xf32>
    %118 = vector.shape_cast %117 : vector<8x32xf32> to vector<1x8x32xf32>
    %c0_56 = arith.constant 0 : index
    %c0_57 = arith.constant 0 : index
    %c0_58 = arith.constant 0 : index
    %119 = vector.load %arg15[%c0_56, %c0_57, %c0_58] : memref<1x8x32xf32, #tpu.memory_space<vmem>>, vector<1x8x32xf32>
    tpu.vector_store %arg15[%c0_56, %c0_57, %c0_58], %118 {strides = array<i32>} : memref<1x8x32xf32, #tpu.memory_space<vmem>>, vector<1x8x32xf32>,
    return
  }
  func.func @transform_0(%arg0: i32) -> (i32, i32, i32) {
    %c0_i32 = arith.constant 0 : i32
    %c0_i32_0 = arith.constant 0 : i32
    %c0_i32_1 = arith.constant 0 : i32
    return %arg0, %c0_i32, %c0_i32_0 : i32, i32, i32
  }
  func.func @transform_1(%arg0: i32) -> (i32, i32) {
    %c0_i32 = arith.constant 0 : i32
    %c0_i32_0 = arith.constant 0 : i32
    %c0_i32_1 = arith.constant 0 : i32
    return %c0_i32, %c0_i32_0 : i32, i32
  }
  func.func @transform_2(%arg0: i32) -> (i32, i32) {
    %c0_i32 = arith.constant 0 : i32
    %c0_i32_0 = arith.constant 0 : i32
    %c0_i32_1 = arith.constant 0 : i32
    return %c0_i32, %c0_i32_0 : i32, i32
  }
  func.func @transform_3(%arg0: i32) -> (i32, i32, i32) {
    %c0_i32 = arith.constant 0 : i32
    %c0_i32_0 = arith.constant 0 : i32
    %c0_i32_1 = arith.constant 0 : i32
    %c0_i32_2 = arith.constant 0 : i32
    return %c0_i32, %c0_i32_0, %c0_i32_1 : i32, i32, i32
  }
  func.func @transform_4(%arg0: i32) -> (i32, i32, i32) {
    %c0_i32 = arith.constant 0 : i32
    %c0_i32_0 = arith.constant 0 : i32
    %c0_i32_1 = arith.constant 0 : i32
    %c0_i32_2 = arith.constant 0 : i32
    return %c0_i32, %c0_i32_0, %c0_i32_1 : i32, i32, i32
  }
  func.func @transform_5(%arg0: i32) -> (i32, i32, i32) {
    %c0_i32 = arith.constant 0 : i32
    %c0_i32_0 = arith.constant 0 : i32
    %c0_i32_1 = arith.constant 0 : i32
    %c0_i32_2 = arith.constant 0 : i32
    return %c0_i32, %c0_i32_0, %c0_i32_1 : i32, i32, i32
  }
  func.func @transform_6(%arg0: i32) -> (i32, i32, i32) {
    %c0_i32 = arith.constant 0 : i32
    %c0_i32_0 = arith.constant 0 : i32
    %c0_i32_1 = arith.constant 0 : i32
    %c0_i32_2 = arith.constant 0 : i32
    return %c0_i32, %c0_i32_0, %c0_i32_1 : i32, i32, i32
  }
  func.func @transform_7(%arg0: i32) -> (i32, i32) {
    %c0_i32 = arith.constant 0 : i32
    %c0_i32_0 = arith.constant 0 : i32
    %c0_i32_1 = arith.constant 0 : i32
    return %c0_i32, %c0_i32_0 : i32, i32
  }
  func.func @transform_8(%arg0: i32) -> (i32, i32) {
    %c0_i32 = arith.constant 0 : i32
    %c0_i32_0 = arith.constant 0 : i32
    %c0_i32_1 = arith.constant 0 : i32
    return %c0_i32, %c0_i32_0 : i32, i32
  }
  func.func @transform_9(%arg0: i32) -> (i32, i32) {
    %c0_i32 = arith.constant 0 : i32
    %c0_i32_0 = arith.constant 0 : i32
    %c0_i32_1 = arith.constant 0 : i32
    return %c0_i32, %c0_i32_0 : i32, i32
  }
  func.func @transform_10(%arg0: i32) -> (i32, i32) {
    %c0_i32 = arith.constant 0 : i32
    %c0_i32_0 = arith.constant 0 : i32
    %c0_i32_1 = arith.constant 0 : i32
    return %c0_i32, %c0_i32_0 : i32, i32
  }
  func.func @transform_11(%arg0: i32) -> (i32, i32) {
    %c0_i32 = arith.constant 0 : i32
    %c0_i32_0 = arith.constant 0 : i32
    %c0_i32_1 = arith.constant 0 : i32
    return %c0_i32, %c0_i32_0 : i32, i32
  }
  func.func @transform_12(%arg0: i32) -> (i32, i32) {
    %c0_i32 = arith.constant 0 : i32
    %c0_i32_0 = arith.constant 0 : i32
    %c0_i32_1 = arith.constant 0 : i32
    return %c0_i32, %c0_i32_0 : i32, i32
  }
  func.func @transform_13(%arg0: i32) -> (i32, i32) {
    %c0_i32 = arith.constant 0 : i32
    %c0_i32_0 = arith.constant 0 : i32
    %c0_i32_1 = arith.constant 0 : i32
    return %c0_i32, %c0_i32_0 : i32, i32
  }
  func.func @transform_14(%arg0: i32) -> (i32, i32, i32) {
    %c0_i32 = arith.constant 0 : i32
    %c0_i32_0 = arith.constant 0 : i32
    %c0_i32_1 = arith.constant 0 : i32
    return %arg0, %c0_i32, %c0_i32_0 : i32, i32, i32
  }
}

</mosaic_0001>

<llo_original>
// kernel: tpu_custom_call.1
$region0: #{tpu_custom_call.1}
  #allocation0 [shape = 'u32[]', space=smem, size = 0x4, offset = 0x4, fixed_abs, tag = 'smem constant byte address 0x4 - core index']
  #allocation1 [shape = 'u32[144,128]{1,0:T(1,128)}', space=vmem, size = 0x12000, scoped, tag = 'internal scratch']
  %s0 = inlined_call_operand.vmem [shape: f32[2,8,32], index: 0, kind: input, shape index: {}]
  %s1 = inlined_call_operand.vmem [shape: f32[1,32], index: 1, kind: input, shape index: {}]
  %s2 = inlined_call_operand.vmem [shape: f32[1,32], index: 2, kind: input, shape index: {}]
  %s3 = inlined_call_operand.vmem [shape: f32[4,32,8], index: 3, kind: input, shape index: {}]
  %s4 = inlined_call_operand.vmem [shape: f32[4,32,8], index: 4, kind: input, shape index: {}]
  %s5 = inlined_call_operand.vmem [shape: f32[4,32,8], index: 5, kind: input, shape index: {}]
  %s6 = inlined_call_operand.vmem [shape: f32[4,8,32], index: 6, kind: input, shape index: {}]
  %s7 = inlined_call_operand.vmem [shape: f32[1,32], index: 7, kind: input, shape index: {}]
  %s8 = inlined_call_operand.vmem [shape: f32[1,32], index: 8, kind: input, shape index: {}]
  %s9 = inlined_call_operand.vmem [shape: f32[1,32], index: 9, kind: input, shape index: {}]
  %s10 = inlined_call_operand.vmem [shape: f32[32,64], index: 10, kind: input, shape index: {}]
  %s11 = inlined_call_operand.vmem [shape: f32[1,64], index: 11, kind: input, shape index: {}]
  %s12 = inlined_call_operand.vmem [shape: f32[64,32], index: 12, kind: input, shape index: {}]
  %s13 = inlined_call_operand.vmem [shape: f32[1,32], index: 13, kind: input, shape index: {}]
  %s14 = inlined_call_operand.hbm [shape: f32[2,8,32], index: 14, kind: output, shape index: {}]
  %s15 = sld [smem:[#allocation0]]
  $region89: #{tpu_custom_call.1} parent=0
    _
  %s17 = ssub.s32 1, %s15
  %s18 = scalar_select 0, %s17, %s15
  $region1: #{tpu_custom_call.1} parent=0
    #allocation2 [shape = 'u8[8192]{0}', space=vmem, size = 0x2000, scoped, tag = 'output window, operand 0']
    #allocation3 [shape = 's32[2]{0}', space=sflag, size = 0x8, scoped, tag = 'scoped memory for tpu_custom_call.1']
    %19 = vsyncpa [#allocation3], 0
    %s20 = scalar_lea.sflag [#allocation3], 1
    %21 = vsyncpa %s20, 0
    loop: start=0, step=1, limit=4
    $region2: #{tpu_custom_call.1} parent=1 // loop_pre_header
      _
    $region3: #{tpu_custom_call.1} parent=1 // loop_header
      %s23 = sphi 0, %s27
      %p24 = scmp.ge.s32.totalorder %s23, 4
      %s33 = sphi 0, %s35
      %s36 = sphi 0, %s33
      %s37 = sphi 0, %s36
      %s53 = sphi 0, %s37
      %s57 = sphi 0, %s57
      %s59 = sphi 0, %s57
      %s60 = sphi 0, %s59
      %s74 = sphi 0, %s60
      %s78 = sphi 0, %s78
      %s80 = sphi 0, %s78
      %s81 = sphi 0, %s80
      %s95 = sphi 0, %s81
      %s99 = sphi 0, %s99
      %s101 = sphi 0, %s99
      %s102 = sphi 0, %s101
      %s116 = sphi 0, %s102
      %s120 = sphi 0, %s120
      %s122 = sphi 0, %s120
      %s123 = sphi 0, %s122
      %s137 = sphi 0, %s123
      %s141 = sphi 0, %s141
      %s143 = sphi 0, %s141
      %s144 = sphi 0, %s143
      %s158 = sphi 0, %s144
      %s162 = sphi 0, %s162
      %s164 = sphi 0, %s162
      %s165 = sphi 0, %s164
      %s179 = sphi 0, %s165
      %s183 = sphi 0, %s183
      %s185 = sphi 0, %s183
      %s186 = sphi 0, %s185
      %s200 = sphi 0, %s186
      %s204 = sphi 0, %s204
      %s206 = sphi 0, %s204
      %s207 = sphi 0, %s206
      %s221 = sphi 0, %s207
      %s225 = sphi 0, %s225
      %s227 = sphi 0, %s225
      %s228 = sphi 0, %s227
      %s242 = sphi 0, %s228
      %s246 = sphi 0, %s246
      %s248 = sphi 0, %s246
      %s249 = sphi 0, %s248
      %s263 = sphi 0, %s249
      %s267 = sphi 0, %s267
      %s269 = sphi 0, %s267
      %s270 = sphi 0, %s269
      %s284 = sphi 0, %s270
      %s288 = sphi 0, %s288
      %s290 = sphi 0, %s288
      %s291 = sphi 0, %s290
      %s305 = sphi 0, %s291
      %s309 = sphi 0, %s309
      %s311 = sphi 0, %s309
      %s312 = sphi 0, %s311
      %s326 = sphi 0, %s312
      %s332 = sphi 0, %s334
      %s335 = sphi 0, %s332
      %s336 = sphi 0, %s335
      %s352 = sphi 0, %s336
    $region4: #{tpu_custom_call.1} parent=1 // loop_header_branch
      %26 = sbr.rel (%p24) target = $region8
    $region5: #{tpu_custom_call.1} parent=1 // loop_body
      %s28 = ssub.s32 %s23, 1
      %s29 = ssub.s32 %s23, 2
      %s30 = sadd.s32 %s23, 1
      %s31 = ssub.s32 %s23, %s30
      %p32 = scmp.eq.s32.totalorder %s31, 0
      %s34 = sadd.s32 %s33, 1
      %s35 = scalar_select %p32, %s33, %s34
      %p38 = pneg %p32
      %p39 = scmp.eq.s32.totalorder %s23, 1
      %p40 = por %p38, %p39
      %p41 = scmp.ne.s32.totalorder %s33, %s36
      %p42 = scmp.eq.s32.totalorder %s23, 0
      %p43 = por %p41, %p42
      %p44 = scmp.ne.s32.totalorder %s33, %s36
      %p45 = scmp.eq.s32.totalorder %s28, 1
      %p46 = por %p44, %p45
      %p47 = scmp.ne.s32.totalorder %s36, %s37
      %p48 = scmp.eq.s32.totalorder %s28, 0
      %p49 = por %p47, %p48
      %p50 = scmp.ne.s32.totalorder %s36, %s37
      %p51 = scmp.eq.s32.totalorder %s29, 1
      %p52 = por %p50, %p51
      %p54 = scmp.ne.s32.totalorder %s37, %s53
      %p55 = scmp.eq.s32.totalorder %s29, 0
      %p56 = por %p54, %p55
      %s58 = sadd.s32 %s57, 1
      %p61 = scmp.eq.s32.totalorder %s23, 1
      %p62 = scmp.ne.s32.totalorder %s57, %s59
      %p63 = scmp.eq.s32.totalorder %s23, 0
      %p64 = por %p62, %p63
      %p65 = scmp.ne.s32.totalorder %s57, %s59
      %p66 = scmp.eq.s32.totalorder %s28, 1
      %p67 = por %p65, %p66
      %p68 = scmp.ne.s32.totalorder %s59, %s60
      %p69 = scmp.eq.s32.totalorder %s28, 0
      %p70 = por %p68, %p69
      %p71 = scmp.ne.s32.totalorder %s59, %s60
      %p72 = scmp.eq.s32.totalorder %s29, 1
      %p73 = por %p71, %p72
      %p75 = scmp.ne.s32.totalorder %s60, %s74
      %p76 = scmp.eq.s32.totalorder %s29, 0
      %p77 = por %p75, %p76
      %s79 = sadd.s32 %s78, 1
      %p82 = scmp.eq.s32.totalorder %s23, 1
      %p83 = scmp.ne.s32.totalorder %s78, %s80
      %p84 = scmp.eq.s32.totalorder %s23, 0
      %p85 = por %p83, %p84
      %p86 = scmp.ne.s32.totalorder %s78, %s80
      %p87 = scmp.eq.s32.totalorder %s28, 1
      %p88 = por %p86, %p87
      %p89 = scmp.ne.s32.totalorder %s80, %s81
      %p90 = scmp.eq.s32.totalorder %s28, 0
      %p91 = por %p89, %p90
      %p92 = scmp.ne.s32.totalorder %s80, %s81
      %p93 = scmp.eq.s32.totalorder %s29, 1
      %p94 = por %p92, %p93
      %p96 = scmp.ne.s32.totalorder %s81, %s95
      %p97 = scmp.eq.s32.totalorder %s29, 0
      %p98 = por %p96, %p97
      %s100 = sadd.s32 %s99, 1
      %p103 = scmp.eq.s32.totalorder %s23, 1
      %p104 = scmp.ne.s32.totalorder %s99, %s101
      %p105 = scmp.eq.s32.totalorder %s23, 0
      %p106 = por %p104, %p105
      %p107 = scmp.ne.s32.totalorder %s99, %s101
      %p108 = scmp.eq.s32.totalorder %s28, 1
      %p109 = por %p107, %p108
      %p110 = scmp.ne.s32.totalorder %s101, %s102
      %p111 = scmp.eq.s32.totalorder %s28, 0
      %p112 = por %p110, %p111
      %p113 = scmp.ne.s32.totalorder %s101, %s102
      %p114 = scmp.eq.s32.totalorder %s29, 1
      %p115 = por %p113, %p114
      %p117 = scmp.ne.s32.totalorder %s102, %s116
      %p118 = scmp.eq.s32.totalorder %s29, 0
      %p119 = por %p117, %p118
      %s121 = sadd.s32 %s120, 1
      %p124 = scmp.eq.s32.totalorder %s23, 1
      %p125 = scmp.ne.s32.totalorder %s120, %s122
      %p126 = scmp.eq.s32.totalorder %s23, 0
      %p127 = por %p125, %p126
      %p128 = scmp.ne.s32.totalorder %s120, %s122
      %p129 = scmp.eq.s32.totalorder %s28, 1
      %p130 = por %p128, %p129
      %p131 = scmp.ne.s32.totalorder %s122, %s123
      %p132 = scmp.eq.s32.totalorder %s28, 0
      %p133 = por %p131, %p132
      %p134 = scmp.ne.s32.totalorder %s122, %s123
      %p135 = scmp.eq.s32.totalorder %s29, 1
      %p136 = por %p134, %p135
      %p138 = scmp.ne.s32.totalorder %s123, %s137
      %p139 = scmp.eq.s32.totalorder %s29, 0
      %p140 = por %p138, %p139
      %s142 = sadd.s32 %s141, 1
      %p145 = scmp.eq.s32.totalorder %s23, 1
      %p146 = scmp.ne.s32.totalorder %s141, %s143
      %p147 = scmp.eq.s32.totalorder %s23, 0
      %p148 = por %p146, %p147
      %p149 = scmp.ne.s32.totalorder %s141, %s143
      %p150 = scmp.eq.s32.totalorder %s28, 1
      %p151 = por %p149, %p150
      %p152 = scmp.ne.s32.totalorder %s143, %s144
      %p153 = scmp.eq.s32.totalorder %s28, 0
      %p154 = por %p152, %p153
      %p155 = scmp.ne.s32.totalorder %s143, %s144
      %p156 = scmp.eq.s32.totalorder %s29, 1
      %p157 = por %p155, %p156
      %p159 = scmp.ne.s32.totalorder %s144, %s158
      %p160 = scmp.eq.s32.totalorder %s29, 0
      %p161 = por %p159, %p160
      %s163 = sadd.s32 %s162, 1
      %p166 = scmp.eq.s32.totalorder %s23, 1
      %p167 = scmp.ne.s32.totalorder %s162, %s164
      %p168 = scmp.eq.s32.totalorder %s23, 0
      %p169 = por %p167, %p168
      %p170 = scmp.ne.s32.totalorder %s162, %s164
      %p171 = scmp.eq.s32.totalorder %s28, 1
      %p172 = por %p170, %p171
      %p173 = scmp.ne.s32.totalorder %s164, %s165
      %p174 = scmp.eq.s32.totalorder %s28, 0
      %p175 = por %p173, %p174
      %p176 = scmp.ne.s32.totalorder %s164, %s165
      %p177 = scmp.eq.s32.totalorder %s29, 1
      %p178 = por %p176, %p177
      %p180 = scmp.ne.s32.totalorder %s165, %s179
      %p181 = scmp.eq.s32.totalorder %s29, 0
      %p182 = por %p180, %p181
      %s184 = sadd.s32 %s183, 1
      %p187 = scmp.eq.s32.totalorder %s23, 1
      %p188 = scmp.ne.s32.totalorder %s183, %s185
      %p189 = scmp.eq.s32.totalorder %s23, 0
      %p190 = por %p188, %p189
      %p191 = scmp.ne.s32.totalorder %s183, %s185
      %p192 = scmp.eq.s32.totalorder %s28, 1
      %p193 = por %p191, %p192
      %p194 = scmp.ne.s32.totalorder %s185, %s186
      %p195 = scmp.eq.s32.totalorder %s28, 0
      %p196 = por %p194, %p195
      %p197 = scmp.ne.s32.totalorder %s185, %s186
      %p198 = scmp.eq.s32.totalorder %s29, 1
      %p199 = por %p197, %p198
      %p201 = scmp.ne.s32.totalorder %s186, %s200
      %p202 = scmp.eq.s32.totalorder %s29, 0
      %p203 = por %p201, %p202
      %s205 = sadd.s32 %s204, 1
      %p208 = scmp.eq.s32.totalorder %s23, 1
      %p209 = scmp.ne.s32.totalorder %s204, %s206
      %p210 = scmp.eq.s32.totalorder %s23, 0
      %p211 = por %p209, %p210
      %p212 = scmp.ne.s32.totalorder %s204, %s206
      %p213 = scmp.eq.s32.totalorder %s28, 1
      %p214 = por %p212, %p213
      %p215 = scmp.ne.s32.totalorder %s206, %s207
      %p216 = scmp.eq.s32.totalorder %s28, 0
      %p217 = por %p215, %p216
      %p218 = scmp.ne.s32.totalorder %s206, %s207
      %p219 = scmp.eq.s32.totalorder %s29, 1
      %p220 = por %p218, %p219
      %p222 = scmp.ne.s32.totalorder %s207, %s221
      %p223 = scmp.eq.s32.totalorder %s29, 0
      %p224 = por %p222, %p223
      %s226 = sadd.s32 %s225, 1
      %p229 = scmp.eq.s32.totalorder %s23, 1
      %p230 = scmp.ne.s32.totalorder %s225, %s227
      %p231 = scmp.eq.s32.totalorder %s23, 0
      %p232 = por %p230, %p231
      %p233 = scmp.ne.s32.totalorder %s225, %s227
      %p234 = scmp.eq.s32.totalorder %s28, 1
      %p235 = por %p233, %p234
      %p236 = scmp.ne.s32.totalorder %s227, %s228
      %p237 = scmp.eq.s32.totalorder %s28, 0
      %p238 = por %p236, %p237
      %p239 = scmp.ne.s32.totalorder %s227, %s228
      %p240 = scmp.eq.s32.totalorder %s29, 1
      %p241 = por %p239, %p240
      %p243 = scmp.ne.s32.totalorder %s228, %s242
      %p244 = scmp.eq.s32.totalorder %s29, 0
      %p245 = por %p243, %p244
      %s247 = sadd.s32 %s246, 1
      %p250 = scmp.eq.s32.totalorder %s23, 1
      %p251 = scmp.ne.s32.totalorder %s246, %s248
      %p252 = scmp.eq.s32.totalorder %s23, 0
      %p253 = por %p251, %p252
      %p254 = scmp.ne.s32.totalorder %s246, %s248
      %p255 = scmp.eq.s32.totalorder %s28, 1
      %p256 = por %p254, %p255
      %p257 = scmp.ne.s32.totalorder %s248, %s249
      %p258 = scmp.eq.s32.totalorder %s28, 0
      %p259 = por %p257, %p258
      %p260 = scmp.ne.s32.totalorder %s248, %s249
      %p261 = scmp.eq.s32.totalorder %s29, 1
      %p262 = por %p260, %p261
      %p264 = scmp.ne.s32.totalorder %s249, %s263
      %p265 = scmp.eq.s32.totalorder %s29, 0
      %p266 = por %p264, %p265
      %s268 = sadd.s32 %s267, 1
      %p271 = scmp.eq.s32.totalorder %s23, 1
      %p272 = scmp.ne.s32.totalorder %s267, %s269
      %p273 = scmp.eq.s32.totalorder %s23, 0
      %p274 = por %p272, %p273
      %p275 = scmp.ne.s32.totalorder %s267, %s269
      %p276 = scmp.eq.s32.totalorder %s28, 1
      %p277 = por %p275, %p276
      %p278 = scmp.ne.s32.totalorder %s269, %s270
      %p279 = scmp.eq.s32.totalorder %s28, 0
      %p280 = por %p278, %p279
      %p281 = scmp.ne.s32.totalorder %s269, %s270
      %p282 = scmp.eq.s32.totalorder %s29, 1
      %p283 = por %p281, %p282
      %p285 = scmp.ne.s32.totalorder %s270, %s284
      %p286 = scmp.eq.s32.totalorder %s29, 0
      %p287 = por %p285, %p286
      %s289 = sadd.s32 %s288, 1
      %p292 = scmp.eq.s32.totalorder %s23, 1
      %p293 = scmp.ne.s32.totalorder %s288, %s290
      %p294 = scmp.eq.s32.totalorder %s23, 0
      %p295 = por %p293, %p294
      %p296 = scmp.ne.s32.totalorder %s288, %s290
      %p297 = scmp.eq.s32.totalorder %s28, 1
      %p298 = por %p296, %p297
      %p299 = scmp.ne.s32.totalorder %s290, %s291
      %p300 = scmp.eq.s32.totalorder %s28, 0
      %p301 = por %p299, %p300
      %p302 = scmp.ne.s32.totalorder %s290, %s291
      %p303 = scmp.eq.s32.totalorder %s29, 1
      %p304 = por %p302, %p303
      %p306 = scmp.ne.s32.totalorder %s291, %s305
      %p307 = scmp.eq.s32.totalorder %s29, 0
      %p308 = por %p306, %p307
      %s310 = sadd.s32 %s309, 1
      %p313 = scmp.eq.s32.totalorder %s23, 1
      %p314 = scmp.ne.s32.totalorder %s309, %s311
      %p315 = scmp.eq.s32.totalorder %s23, 0
      %p316 = por %p314, %p315
      %p317 = scmp.ne.s32.totalorder %s309, %s311
      %p318 = scmp.eq.s32.totalorder %s28, 1
      %p319 = por %p317, %p318
      %p320 = scmp.ne.s32.totalorder %s311, %s312
      %p321 = scmp.eq.s32.totalorder %s28, 0
      %p322 = por %p320, %p321
      %p323 = scmp.ne.s32.totalorder %s311, %s312
      %p324 = scmp.eq.s32.totalorder %s29, 1
      %p325 = por %p323, %p324
      %p327 = scmp.ne.s32.totalorder %s312, %s326
      %p328 = scmp.eq.s32.totalorder %s29, 0
      %p329 = por %p327, %p328
      %s330 = ssub.s32 %s23, %s30
      %p331 = scmp.eq.s32.totalorder %s330, 0
      %s333 = sadd.s32 %s332, 1
      %s334 = scalar_select %p331, %s332, %s333
      %p337 = pneg %p331
      %p338 = scmp.eq.s32.totalorder %s23, 1
      %p339 = por %p337, %p338
      %p340 = scmp.ne.s32.totalorder %s332, %s335
      %p341 = scmp.eq.s32.totalorder %s23, 0
      %p342 = por %p340, %p341
      %p343 = scmp.ne.s32.totalorder %s332, %s335
      %p344 = scmp.eq.s32.totalorder %s28, 1
      %p345 = por %p343, %p344
      %p346 = scmp.ne.s32.totalorder %s335, %s336
      %p347 = scmp.eq.s32.totalorder %s28, 0
      %p348 = por %p346, %p347
      %p349 = scmp.ne.s32.totalorder %s335, %s336
      %p350 = scmp.eq.s32.totalorder %s29, 1
      %p351 = por %p349, %p350
      %p353 = scmp.ne.s32.totalorder %s336, %s352
      %p354 = scmp.eq.s32.totalorder %s29, 0
      %p355 = por %p353, %p354
      %p356 = scmp.le.s32.totalorder 1, %s23
      %p357 = scmp.lt.s32.totalorder %s23, 3
      %p358 = pnand %p356, %p357
      %p359 = pneg %p358
      // Predicated region
      $region9: #{tpu_custom_call.1} parent=5 // pred_check
        _
      $region10: #{tpu_custom_call.1} parent=5 // pred_check_branch
        %361 = sbr.rel (%p358) target = $region12
      $region11: #{tpu_custom_call.1} parent=5 // pred_region
        %s362 = ssub.s32 %s23, 1
        // Predicated region
        $region13: #{tpu_custom_call.1} parent=11 // pred_check
          %p363 = pneg %p70
        $region14: #{tpu_custom_call.1} parent=11 // pred_check_branch
          %365 = sbr.rel (%p363) target = $region16
        $region15: #{tpu_custom_call.1} parent=11 // pred_region
          _
        $region16: #{tpu_custom_call.1} parent=11 // pred_fallthru
          _
        // Predicated region
        $region17: #{tpu_custom_call.1} parent=11 // pred_check
          %p366 = pneg %p91
        $region18: #{tpu_custom_call.1} parent=11 // pred_check_branch
          %368 = sbr.rel (%p366) target = $region20
        $region19: #{tpu_custom_call.1} parent=11 // pred_region
          _
        $region20: #{tpu_custom_call.1} parent=11 // pred_fallthru
          _
        // Predicated region
        $region21: #{tpu_custom_call.1} parent=11 // pred_check
          %p369 = pneg %p112
        $region22: #{tpu_custom_call.1} parent=11 // pred_check_branch
          %371 = sbr.rel (%p369) target = $region24
        $region23: #{tpu_custom_call.1} parent=11 // pred_region
          _
        $region24: #{tpu_custom_call.1} parent=11 // pred_fallthru
          _
        // Predicated region
        $region25: #{tpu_custom_call.1} parent=11 // pred_check
          %p372 = pneg %p133
        $region26: #{tpu_custom_call.1} parent=11 // pred_check_branch
          %374 = sbr.rel (%p372) target = $region28
        $region27: #{tpu_custom_call.1} parent=11 // pred_region
          _
        $region28: #{tpu_custom_call.1} parent=11 // pred_fallthru
          _
        // Predicated region
        $region29: #{tpu_custom_call.1} parent=11 // pred_check
          %p375 = pneg %p154
        $region30: #{tpu_custom_call.1} parent=11 // pred_check_branch
          %377 = sbr.rel (%p375) target = $region32
        $region31: #{tpu_custom_call.1} parent=11 // pred_region
          _
        $region32: #{tpu_custom_call.1} parent=11 // pred_fallthru
          _
        // Predicated region
        $region33: #{tpu_custom_call.1} parent=11 // pred_check
          %p378 = pneg %p175
        $region34: #{tpu_custom_call.1} parent=11 // pred_check_branch
          %380 = sbr.rel (%p378) target = $region36
        $region35: #{tpu_custom_call.1} parent=11 // pred_region
          _
        $region36: #{tpu_custom_call.1} parent=11 // pred_fallthru
          _
        // Predicated region
        $region37: #{tpu_custom_call.1} parent=11 // pred_check
          %p381 = pneg %p196
        $region38: #{tpu_custom_call.1} parent=11 // pred_check_branch
          %383 = sbr.rel (%p381) target = $region40
        $region39: #{tpu_custom_call.1} parent=11 // pred_region
          _
        $region40: #{tpu_custom_call.1} parent=11 // pred_fallthru
          _
        // Predicated region
        $region41: #{tpu_custom_call.1} parent=11 // pred_check
          %p384 = pneg %p217
        $region42: #{tpu_custom_call.1} parent=11 // pred_check_branch
          %386 = sbr.rel (%p384) target = $region44
        $region43: #{tpu_custom_call.1} parent=11 // pred_region
          _
        $region44: #{tpu_custom_call.1} parent=11 // pred_fallthru
          _
        // Predicated region
        $region45: #{tpu_custom_call.1} parent=11 // pred_check
          %p387 = pneg %p238
        $region46: #{tpu_custom_call.1} parent=11 // pred_check_branch
          %389 = sbr.rel (%p387) target = $region48
        $region47: #{tpu_custom_call.1} parent=11 // pred_region
          _
        $region48: #{tpu_custom_call.1} parent=11 // pred_fallthru
          _
        // Predicated region
        $region49: #{tpu_custom_call.1} parent=11 // pred_check
          %p390 = pneg %p259
        $region50: #{tpu_custom_call.1} parent=11 // pred_check_branch
          %392 = sbr.rel (%p390) target = $region52
        $region51: #{tpu_custom_call.1} parent=11 // pred_region
          _
        $region52: #{tpu_custom_call.1} parent=11 // pred_fallthru
          _
        // Predicated region
        $region53: #{tpu_custom_call.1} parent=11 // pred_check
          %p393 = pneg %p280
        $region54: #{tpu_custom_call.1} parent=11 // pred_check_branch
          %395 = sbr.rel (%p393) target = $region56
        $region55: #{tpu_custom_call.1} parent=11 // pred_region
          _
        $region56: #{tpu_custom_call.1} parent=11 // pred_fallthru
          _
        // Predicated region
        $region57: #{tpu_custom_call.1} parent=11 // pred_check
          %p396 = pneg %p301
        $region58: #{tpu_custom_call.1} parent=11 // pred_check_branch
          %398 = sbr.rel (%p396) target = $region60
        $region59: #{tpu_custom_call.1} parent=11 // pred_region
          _
        $region60: #{tpu_custom_call.1} parent=11 // pred_fallthru
          _
        // Predicated region
        $region61: #{tpu_custom_call.1} parent=11 // pred_check
          %p399 = pneg %p322
        $region62: #{tpu_custom_call.1} parent=11 // pred_check_branch
          %401 = sbr.rel (%p399) target = $region64
        $region63: #{tpu_custom_call.1} parent=11 // pred_region
          _
        $region64: #{tpu_custom_call.1} parent=11 // pred_fallthru
          _
      $region12: #{tpu_custom_call.1} parent=5 // pred_fallthru
        _
      %p402 = scmp.lt.s32.totalorder %s23, 2
      // Predicated region
      $region65: #{tpu_custom_call.1} parent=5 // pred_check
        %p403 = pneg %p402
      $region66: #{tpu_custom_call.1} parent=5 // pred_check_branch
        %405 = sbr.rel (%p403) target = $region68
      $region67: #{tpu_custom_call.1} parent=5 // pred_region
        // Predicated region
        $region69: #{tpu_custom_call.1} parent=67 // pred_check
          %p406 = pneg %p43
        $region70: #{tpu_custom_call.1} parent=67 // pred_check_branch
          %408 = sbr.rel (%p406) target = $region72
        $region71: #{tpu_custom_call.1} parent=67 // pred_region
          %p409 = scmp.lt.s32.totalorder %s23, 1
          %s410 = scalar_select %p409, %s23, 1
          %s411 = smul.addr %s410, 8
          %s412 = scalar_lea.vmem %s0, %s411
        $region72: #{tpu_custom_call.1} parent=67 // pred_fallthru
          _
      $region68: #{tpu_custom_call.1} parent=5 // pred_fallthru
        _
      %p413 = scmp.le.s32.totalorder 1, %s23
      %p414 = scmp.lt.s32.totalorder %s23, 3
      %p415 = pnand %p413, %p414
      %p416 = pneg %p415
      // Predicated region
      $region73: #{tpu_custom_call.1} parent=5 // pred_check
        _
      $region74: #{tpu_custom_call.1} parent=5 // pred_check_branch
        %418 = sbr.rel (%p415) target = $region76
      $region75: #{tpu_custom_call.1} parent=5 // pred_region
        %s419 = ssub.s32 %s23, 1
        %p420 = scmp.lt.s32.totalorder %s28, 1
        %s421 = scalar_select %p420, %s28, 1
        %s422 = smul.addr %s421, 8
        %s423 = scalar_lea.vmem %s0, %s422
        %p424 = pneg %p49
        %p425 = pneg %p46
        %p426 = pneg %p70
        %p427 = pneg %p67
        %p428 = pneg %p91
        %p429 = pneg %p88
        %p430 = pneg %p112
        %p431 = pneg %p109
        %p432 = pneg %p133
        %p433 = pneg %p130
        %p434 = pneg %p154
        %p435 = pneg %p151
        %p436 = pneg %p175
        %p437 = pneg %p172
        %p438 = pneg %p196
        %p439 = pneg %p193
        %p440 = pneg %p217
        %p441 = pneg %p214
        %p442 = pneg %p238
        %p443 = pneg %p235
        %p444 = pneg %p259
        %p445 = pneg %p256
        %p446 = pneg %p280
        %p447 = pneg %p277
        %p448 = pneg %p301
        %p449 = pneg %p298
        %p450 = pneg %p322
        %p451 = pneg %p319
        %p452 = pneg %p348
        %p453 = pneg %p345
        %s454 = sand.u32 %s335, 1
        %s455 = scalar_lea.sflag [#allocation3], %s454
        %s456 = sand.u32 %s335, 1
        %s457 = smul.addr %s456, 8
        %s458 = scalar_lea.vmem [#allocation2], %s457
        %p459 = scmp.lt.s32.totalorder %s28, 1
        %s460 = scalar_select %p459, %s28, 1
        %s461 = smul.addr %s460, 8
        %s462 = scalar_lea.vmem %s0, %s461
        %v463 = vld [vmem:[%s462] sm:$0xff]
        %v464 = vld [vmem:[%s1] sm:$0x1]
        %v465 = vld [vmem:[%s2] sm:$0x1]
        %vm466 = vcmask 261120
        %v467 = vsel %vm466, %v463, 0.0
        %468 = vadd.xlane.f32.xlu0 %v467
        %v469 = vpop.xlane.xlu0 %468
        %v470 = vrcp.pop 32.0
        %v471 = vmul.f32 %v469, %v470
        %v472 = vsub.f32 %v463, %v471
        %v473 = vmul.f32 %v472, %v472
        %v474 = vsel %vm466, %v473, 0.0
        %475 = vadd.xlane.f32.xlu0 %v474
        %v476 = vpop.xlane.xlu0 %475
        %v477 = vmul.f32 %v476, %v470
        %v478 = vadd.f32 %v477, 1e-05
        %v479 = vrsqrt.pop %v478
        %v480 = vmul.f32 %v472, %v479
        %v482 = vlaneseq
        %v483 = vshrl.u32 %v482, 7
        %v484 = vsub.s32 0, %v483
        %v485 = vrot.slane %v464, %v484
        %v487 = vmul.f32 %v480, %v485
        %v489 = vlaneseq
        %v490 = vshrl.u32 %v489, 7
        %v491 = vsub.s32 0, %v490
        %v492 = vrot.slane %v465, %v491
        %v494 = vadd.f32 %v487, %v492
        %v495 = vld [vmem:[%s3] sm:$0xff]
        %v496 = vld [vmem:[%s3 + $0x8] sm:$0xff]
        %v497 = vld [vmem:[%s3 + $0x10] sm:$0xff]
        %v498 = vld [vmem:[%s3 + $0x18] sm:$0xff]
        %v499 = vld [vmem:[%s3 + $0x20] sm:$0xff]
        %v500 = vld [vmem:[%s3 + $0x28] sm:$0xff]
        %v501 = vld [vmem:[%s3 + $0x30] sm:$0xff]
        %v502 = vld [vmem:[%s3 + $0x38] sm:$0xff]
        %v503 = vld [vmem:[%s3 + $0x40] sm:$0xff]
        %v504 = vld [vmem:[%s3 + $0x48] sm:$0xff]
        %v505 = vld [vmem:[%s3 + $0x50] sm:$0xff]
        %v506 = vld [vmem:[%s3 + $0x58] sm:$0xff]
        %v507 = vld [vmem:[%s3 + $0x60] sm:$0xff]
        %v508 = vld [vmem:[%s3 + $0x68] sm:$0xff]
        %v509 = vld [vmem:[%s3 + $0x70] sm:$0xff]
        %v510 = vld [vmem:[%s3 + $0x78] sm:$0xff]
        %v511 = vld [vmem:[%s4] sm:$0xff]
        %v512 = vld [vmem:[%s4 + $0x8] sm:$0xff]
        %v513 = vld [vmem:[%s4 + $0x10] sm:$0xff]
        %v514 = vld [vmem:[%s4 + $0x18] sm:$0xff]
        %v515 = vld [vmem:[%s4 + $0x20] sm:$0xff]
        %v516 = vld [vmem:[%s4 + $0x28] sm:$0xff]
        %v517 = vld [vmem:[%s4 + $0x30] sm:$0xff]
        %v518 = vld [vmem:[%s4 + $0x38] sm:$0xff]
        %v519 = vld [vmem:[%s4 + $0x40] sm:$0xff]
        %v520 = vld [vmem:[%s4 + $0x48] sm:$0xff]
        %v521 = vld [vmem:[%s4 + $0x50] sm:$0xff]
        %v522 = vld [vmem:[%s4 + $0x58] sm:$0xff]
        %v523 = vld [vmem:[%s4 + $0x60] sm:$0xff]
        %v524 = vld [vmem:[%s4 + $0x68] sm:$0xff]
        %v525 = vld [vmem:[%s4 + $0x70] sm:$0xff]
        %v526 = vld [vmem:[%s4 + $0x78] sm:$0xff]
        %v527 = vld [vmem:[%s5] sm:$0xff]
        %v528 = vld [vmem:[%s5 + $0x8] sm:$0xff]
        %v529 = vld [vmem:[%s5 + $0x10] sm:$0xff]
        %v530 = vld [vmem:[%s5 + $0x18] sm:$0xff]
        %v531 = vld [vmem:[%s5 + $0x20] sm:$0xff]
        %v532 = vld [vmem:[%s5 + $0x28] sm:$0xff]
        %v533 = vld [vmem:[%s5 + $0x30] sm:$0xff]
        %v534 = vld [vmem:[%s5 + $0x38] sm:$0xff]
        %v535 = vld [vmem:[%s5 + $0x40] sm:$0xff]
        %v536 = vld [vmem:[%s5 + $0x48] sm:$0xff]
        %v537 = vld [vmem:[%s5 + $0x50] sm:$0xff]
        %v538 = vld [vmem:[%s5 + $0x58] sm:$0xff]
        %v539 = vld [vmem:[%s5 + $0x60] sm:$0xff]
        %v540 = vld [vmem:[%s5 + $0x68] sm:$0xff]
        %v541 = vld [vmem:[%s5 + $0x70] sm:$0xff]
        %v542 = vld [vmem:[%s5 + $0x78] sm:$0xff]
        %v543 = vld [vmem:[%s6] sm:$0xff]
        %v544 = vld [vmem:[%s6 + $0x8] sm:$0xff]
        %v545 = vld [vmem:[%s6 + $0x10] sm:$0xff]
        %v546 = vld [vmem:[%s6 + $0x18] sm:$0xff]
        %v548 = vsel %vm466, %v494, 0
        %550 = vmatprep.subr.mxu0 0.0
        %551 = vmatpush1.msra.mxu0 %v495
        %552 = vmatprep.subr.mxu0 0.0
        %553 = vmatpush1.msra.mxu0 %v496
        %554 = vmatprep.subr.mxu0 0.0
        %555 = vmatpush1.msra.mxu0 %v497
        %556 = vmatprep.subr.mxu0 0.0
        %557 = vmatpush1.msra.mxu0 %v498
        %558 = vmatprep.subr.mxu0 0.0
        %559 = vmatpush1.msra.mxu0 0.0
        %560 = vmatprep.subr.mxu0 0.0
        %561 = vmatpush1.msra.mxu0 0.0
        %562 = vmatprep.subr.mxu0 0.0
        %563 = vmatpush1.msra.mxu0 0.0
        %564 = vmatprep.subr.mxu0 0.0
        %565 = vmatpush1.msra.mxu0 0.0
        %566 = vmatprep.subr.mxu0 0.0
        %567 = vmatpush1.msra.mxu0 0.0
        %568 = vmatprep.subr.mxu0 0.0
        %569 = vmatpush1.msra.mxu0 0.0
        %570 = vmatprep.subr.mxu0 0.0
        %571 = vmatpush1.msra.mxu0 0.0
        %572 = vmatprep.subr.mxu0 0.0
        %573 = vmatpush1.msra.mxu0 0.0
        %574 = vmatprep.subr.mxu0 0.0
        %575 = vmatpush1.msra.mxu0 0.0
        %576 = vmatprep.subr.mxu0 0.0
        %577 = vmatpush1.msra.mxu0 0.0
        %578 = vmatprep.subr.mxu0 0.0
        %579 = vmatpush1.msra.mxu0 0.0
        %580 = vmatprep.subr.mxu0 0.0
        %581 = vmatpush1.msra.mxu0 0.0
        %582 = vmatprep.subr.mxu0 0.0
        %583 = vmatpush1.msra.mxu0 0.0
        %584 = vmatprep.subr.mxu0 0.0
        %585 = vmatpush1.msra.mxu0 0.0
        %586 = vmatprep.subr.mxu0 0.0
        %587 = vmatpush1.msra.mxu0 0.0
        %588 = vmatprep.subr.mxu0 0.0
        %589 = vmatpush1.msra.mxu0 0.0
        %590 = vmatprep.subr.mxu0 0.0
        %591 = vmatpush1.msra.mxu0 0.0
        %592 = vmatprep.subr.mxu0 0.0
        %593 = vmatpush1.msra.mxu0 0.0
        %594 = vmatprep.subr.mxu0 0.0
        %595 = vmatpush1.msra.mxu0 0.0
        %596 = vmatprep.subr.mxu0 0.0
        %597 = vmatpush1.msra.mxu0 0.0
        %598 = vmatprep.subr.mxu0 0.0
        %599 = vmatpush1.msra.mxu0 0.0
        %600 = vmatprep.subr.mxu0 0.0
        %601 = vmatpush1.msra.mxu0 0.0
        %602 = vmatprep.subr.mxu0 0.0
        %603 = vmatpush1.msra.mxu0 0.0
        %604 = vmatprep.subr.mxu0 0.0
        %605 = vmatpush1.msra.mxu0 0.0
        %606 = vmatprep.subr.mxu0 0.0
        %607 = vmatpush1.msra.mxu0 0.0
        %608 = vmatprep.subr.mxu0 0.0
        %609 = vmatpush1.msra.mxu0 0.0
        %610 = vmatprep.subr.mxu0 0.0
        %611 = vmatpush1.msra.mxu0 0.0
        %612 = vmatprep.subr.mxu0 0.0
        %613 = vmatpush1.msra.mxu0 0.0
        %614 = vmatprep.mubr.f32.mxu0 0.0
        %615 = vmatmul.mubr.f32.gmra.mrb[0].mxu0 %v548
        %v616 = vpop.f32.mrb[0].mxu0
        %v617 = vadd.f32 0.0, %v616
        %v618 = vpop.f32.mrb[0].mxu0
        %619 = vdwg.mxu0
        %620 = vmatprep.subr.mxu0 0.0
        %621 = vmatpush1.msra.mxu0 %v499
        %622 = vmatprep.subr.mxu0 0.0
        %623 = vmatpush1.msra.mxu0 %v500
        %624 = vmatprep.subr.mxu0 0.0
        %625 = vmatpush1.msra.mxu0 %v501
        %626 = vmatprep.subr.mxu0 0.0
        %627 = vmatpush1.msra.mxu0 %v502
        %628 = vmatprep.subr.mxu0 0.0
        %629 = vmatpush1.msra.mxu0 0.0
        %630 = vmatprep.subr.mxu0 0.0
        %631 = vmatpush1.msra.mxu0 0.0
        %632 = vmatprep.subr.mxu0 0.0
        %633 = vmatpush1.msra.mxu0 0.0
        %634 = vmatprep.subr.mxu0 0.0
        %635 = vmatpush1.msra.mxu0 0.0
        %636 = vmatprep.subr.mxu0 0.0
        %637 = vmatpush1.msra.mxu0 0.0
        %638 = vmatprep.subr.mxu0 0.0
        %639 = vmatpush1.msra.mxu0 0.0
        %640 = vmatprep.subr.mxu0 0.0
        %641 = vmatpush1.msra.mxu0 0.0
        %642 = vmatprep.subr.mxu0 0.0
        %643 = vmatpush1.msra.mxu0 0.0
        %644 = vmatprep.subr.mxu0 0.0
        %645 = vmatpush1.msra.mxu0 0.0
        %646 = vmatprep.subr.mxu0 0.0
        %647 = vmatpush1.msra.mxu0 0.0
        %648 = vmatprep.subr.mxu0 0.0
        %649 = vmatpush1.msra.mxu0 0.0
        %650 = vmatprep.subr.mxu0 0.0
        %651 = vmatpush1.msra.mxu0 0.0
        %652 = vmatprep.subr.mxu0 0.0
        %653 = vmatpush1.msra.mxu0 0.0
        %654 = vmatprep.subr.mxu0 0.0
        %655 = vmatpush1.msra.mxu0 0.0
        %656 = vmatprep.subr.mxu0 0.0
        %657 = vmatpush1.msra.mxu0 0.0
        %658 = vmatprep.subr.mxu0 0.0
        %659 = vmatpush1.msra.mxu0 0.0
        %660 = vmatprep.subr.mxu0 0.0
        %661 = vmatpush1.msra.mxu0 0.0
        %662 = vmatprep.subr.mxu0 0.0
        %663 = vmatpush1.msra.mxu0 0.0
        %664 = vmatprep.subr.mxu0 0.0
        %665 = vmatpush1.msra.mxu0 0.0
        %666 = vmatprep.subr.mxu0 0.0
        %667 = vmatpush1.msra.mxu0 0.0
        %668 = vmatprep.subr.mxu0 0.0
        %669 = vmatpush1.msra.mxu0 0.0
        %670 = vmatprep.subr.mxu0 0.0
        %671 = vmatpush1.msra.mxu0 0.0
        %672 = vmatprep.subr.mxu0 0.0
        %673 = vmatpush1.msra.mxu0 0.0
        %674 = vmatprep.subr.mxu0 0.0
        %675 = vmatpush1.msra.mxu0 0.0
        %676 = vmatprep.subr.mxu0 0.0
        %677 = vmatpush1.msra.mxu0 0.0
        %678 = vmatprep.subr.mxu0 0.0
        %679 = vmatpush1.msra.mxu0 0.0
        %680 = vmatprep.subr.mxu0 0.0
        %681 = vmatpush1.msra.mxu0 0.0
        %682 = vmatprep.subr.mxu0 0.0
        %683 = vmatpush1.msra.mxu0 0.0
        %684 = vmatprep.mubr.f32.mxu0 0.0
        %685 = vmatmul.mubr.f32.gmra.mrb[0].mxu0 %v548
        %v686 = vpop.f32.mrb[0].mxu0
        %v687 = vadd.f32 0.0, %v686
        %v688 = vpop.f32.mrb[0].mxu0
        %689 = vdwg.mxu0
        %690 = vmatprep.subr.mxu0 0.0
        %691 = vmatpush1.msra.mxu0 %v503
        %692 = vmatprep.subr.mxu0 0.0
        %693 = vmatpush1.msra.mxu0 %v504
        %694 = vmatprep.subr.mxu0 0.0
        %695 = vmatpush1.msra.mxu0 %v505
        %696 = vmatprep.subr.mxu0 0.0
        %697 = vmatpush1.msra.mxu0 %v506
        %698 = vmatprep.subr.mxu0 0.0
        %699 = vmatpush1.msra.mxu0 0.0
        %700 = vmatprep.subr.mxu0 0.0
        %701 = vmatpush1.msra.mxu0 0.0
        %702 = vmatprep.subr.mxu0 0.0
        %703 = vmatpush1.msra.mxu0 0.0
        %704 = vmatprep.subr.mxu0 0.0
        %705 = vmatpush1.msra.mxu0 0.0
        %706 = vmatprep.subr.mxu0 0.0
        %707 = vmatpush1.msra.mxu0 0.0
        %708 = vmatprep.subr.mxu0 0.0
        %709 = vmatpush1.msra.mxu0 0.0
        %710 = vmatprep.subr.mxu0 0.0
        %711 = vmatpush1.msra.mxu0 0.0
        %712 = vmatprep.subr.mxu0 0.0
        %713 = vmatpush1.msra.mxu0 0.0
        %714 = vmatprep.subr.mxu0 0.0
        %715 = vmatpush1.msra.mxu0 0.0
        %716 = vmatprep.subr.mxu0 0.0
        %717 = vmatpush1.msra.mxu0 0.0
        %718 = vmatprep.subr.mxu0 0.0
        %719 = vmatpush1.msra.mxu0 0.0
        %720 = vmatprep.subr.mxu0 0.0
        %721 = vmatpush1.msra.mxu0 0.0
        %722 = vmatprep.subr.mxu0 0.0
        %723 = vmatpush1.msra.mxu0 0.0
        %724 = vmatprep.subr.mxu0 0.0
        %725 = vmatpush1.msra.mxu0 0.0
        %726 = vmatprep.subr.mxu0 0.0
        %727 = vmatpush1.msra.mxu0 0.0
        %728 = vmatprep.subr.mxu0 0.0
        %729 = vmatpush1.msra.mxu0 0.0
        %730 = vmatprep.subr.mxu0 0.0
        %731 = vmatpush1.msra.mxu0 0.0
        %732 = vmatprep.subr.mxu0 0.0
        %733 = vmatpush1.msra.mxu0 0.0
        %734 = vmatprep.subr.mxu0 0.0
        %735 = vmatpush1.msra.mxu0 0.0
        %736 = vmatprep.subr.mxu0 0.0
        %737 = vmatpush1.msra.mxu0 0.0
        %738 = vmatprep.subr.mxu0 0.0
        %739 = vmatpush1.msra.mxu0 0.0
        %740 = vmatprep.subr.mxu0 0.0
        %741 = vmatpush1.msra.mxu0 0.0
        %742 = vmatprep.subr.mxu0 0.0
        %743 = vmatpush1.msra.mxu0 0.0
        %744 = vmatprep.subr.mxu0 0.0
        %745 = vmatpush1.msra.mxu0 0.0
        %746 = vmatprep.subr.mxu0 0.0
        %747 = vmatpush1.msra.mxu0 0.0
        %748 = vmatprep.subr.mxu0 0.0
        %749 = vmatpush1.msra.mxu0 0.0
        %750 = vmatprep.subr.mxu0 0.0
        %751 = vmatpush1.msra.mxu0 0.0
        %752 = vmatprep.subr.mxu0 0.0
        %753 = vmatpush1.msra.mxu0 0.0
        %754 = vmatprep.mubr.f32.mxu0 0.0
        %755 = vmatmul.mubr.f32.gmra.mrb[0].mxu0 %v548
        %v756 = vpop.f32.mrb[0].mxu0
        %v757 = vadd.f32 0.0, %v756
        %v758 = vpop.f32.mrb[0].mxu0
        %759 = vdwg.mxu0
        %760 = vmatprep.subr.mxu0 0.0
        %761 = vmatpush1.msra.mxu0 %v507
        %762 = vmatprep.subr.mxu0 0.0
        %763 = vmatpush1.msra.mxu0 %v508
        %764 = vmatprep.subr.mxu0 0.0
        %765 = vmatpush1.msra.mxu0 %v509
        %766 = vmatprep.subr.mxu0 0.0
        %767 = vmatpush1.msra.mxu0 %v510
        %768 = vmatprep.subr.mxu0 0.0
        %769 = vmatpush1.msra.mxu0 0.0
        %770 = vmatprep.subr.mxu0 0.0
        %771 = vmatpush1.msra.mxu0 0.0
        %772 = vmatprep.subr.mxu0 0.0
        %773 = vmatpush1.msra.mxu0 0.0
        %774 = vmatprep.subr.mxu0 0.0
        %775 = vmatpush1.msra.mxu0 0.0
        %776 = vmatprep.subr.mxu0 0.0
        %777 = vmatpush1.msra.mxu0 0.0
        %778 = vmatprep.subr.mxu0 0.0
        %779 = vmatpush1.msra.mxu0 0.0
        %780 = vmatprep.subr.mxu0 0.0
        %781 = vmatpush1.msra.mxu0 0.0
        %782 = vmatprep.subr.mxu0 0.0
        %783 = vmatpush1.msra.mxu0 0.0
        %784 = vmatprep.subr.mxu0 0.0
        %785 = vmatpush1.msra.mxu0 0.0
        %786 = vmatprep.subr.mxu0 0.0
        %787 = vmatpush1.msra.mxu0 0.0
        %788 = vmatprep.subr.mxu0 0.0
        %789 = vmatpush1.msra.mxu0 0.0
        %790 = vmatprep.subr.mxu0 0.0
        %791 = vmatpush1.msra.mxu0 0.0
        %792 = vmatprep.subr.mxu0 0.0
        %793 = vmatpush1.msra.mxu0 0.0
        %794 = vmatprep.subr.mxu0 0.0
        %795 = vmatpush1.msra.mxu0 0.0
        %796 = vmatprep.subr.mxu0 0.0
        %797 = vmatpush1.msra.mxu0 0.0
        %798 = vmatprep.subr.mxu0 0.0
        %799 = vmatpush1.msra.mxu0 0.0
        %800 = vmatprep.subr.mxu0 0.0
        %801 = vmatpush1.msra.mxu0 0.0
        %802 = vmatprep.subr.mxu0 0.0
        %803 = vmatpush1.msra.mxu0 0.0
        %804 = vmatprep.subr.mxu0 0.0
        %805 = vmatpush1.msra.mxu0 0.0
        %806 = vmatprep.subr.mxu0 0.0
        %807 = vmatpush1.msra.mxu0 0.0
        %808 = vmatprep.subr.mxu0 0.0
        %809 = vmatpush1.msra.mxu0 0.0
        %810 = vmatprep.subr.mxu0 0.0
        %811 = vmatpush1.msra.mxu0 0.0
        %812 = vmatprep.subr.mxu0 0.0
        %813 = vmatpush1.msra.mxu0 0.0
        %814 = vmatprep.subr.mxu0 0.0
        %815 = vmatpush1.msra.mxu0 0.0
        %816 = vmatprep.subr.mxu0 0.0
        %817 = vmatpush1.msra.mxu0 0.0
        %818 = vmatprep.subr.mxu0 0.0
        %819 = vmatpush1.msra.mxu0 0.0
        %820 = vmatprep.subr.mxu0 0.0
        %821 = vmatpush1.msra.mxu0 0.0
        %822 = vmatprep.subr.mxu0 0.0
        %823 = vmatpush1.msra.mxu0 0.0
        %824 = vmatprep.mubr.f32.mxu0 0.0
        %825 = vmatmul.mubr.f32.gmra.mrb[0].mxu0 %v548
        %v826 = vpop.f32.mrb[0].mxu0
        %v827 = vadd.f32 0.0, %v826
        %v828 = vpop.f32.mrb[0].mxu0
        %829 = vdwg.mxu0
        %830 = vmatprep.subr.mxu0 0.0
        %831 = vmatpush1.msra.mxu0 %v511
        %832 = vmatprep.subr.mxu0 0.0
        %833 = vmatpush1.msra.mxu0 %v512
        %834 = vmatprep.subr.mxu0 0.0
        %835 = vmatpush1.msra.mxu0 %v513
        %836 = vmatprep.subr.mxu0 0.0
        %837 = vmatpush1.msra.mxu0 %v514
        %838 = vmatprep.subr.mxu0 0.0
        %839 = vmatpush1.msra.mxu0 0.0
        %840 = vmatprep.subr.mxu0 0.0
        %841 = vmatpush1.msra.mxu0 0.0
        %842 = vmatprep.subr.mxu0 0.0
        %843 = vmatpush1.msra.mxu0 0.0
        %844 = vmatprep.subr.mxu0 0.0
        %845 = vmatpush1.msra.mxu0 0.0
        %846 = vmatprep.subr.mxu0 0.0
        %847 = vmatpush1.msra.mxu0 0.0
        %848 = vmatprep.subr.mxu0 0.0
        %849 = vmatpush1.msra.mxu0 0.0
        %850 = vmatprep.subr.mxu0 0.0
        %851 = vmatpush1.msra.mxu0 0.0
        %852 = vmatprep.subr.mxu0 0.0
        %853 = vmatpush1.msra.mxu0 0.0
        %854 = vmatprep.subr.mxu0 0.0
        %855 = vmatpush1.msra.mxu0 0.0
        %856 = vmatprep.subr.mxu0 0.0
        %857 = vmatpush1.msra.mxu0 0.0
        %858 = vmatprep.subr.mxu0 0.0
        %859 = vmatpush1.msra.mxu0 0.0
        %860 = vmatprep.subr.mxu0 0.0
        %861 = vmatpush1.msra.mxu0 0.0
        %862 = vmatprep.subr.mxu0 0.0
        %863 = vmatpush1.msra.mxu0 0.0
        %864 = vmatprep.subr.mxu0 0.0
        %865 = vmatpush1.msra.mxu0 0.0
        %866 = vmatprep.subr.mxu0 0.0
        %867 = vmatpush1.msra.mxu0 0.0
        %868 = vmatprep.subr.mxu0 0.0
        %869 = vmatpush1.msra.mxu0 0.0
        %870 = vmatprep.subr.mxu0 0.0
        %871 = vmatpush1.msra.mxu0 0.0
        %872 = vmatprep.subr.mxu0 0.0
        %873 = vmatpush1.msra.mxu0 0.0
        %874 = vmatprep.subr.mxu0 0.0
        %875 = vmatpush1.msra.mxu0 0.0
        %876 = vmatprep.subr.mxu0 0.0
        %877 = vmatpush1.msra.mxu0 0.0
        %878 = vmatprep.subr.mxu0 0.0
        %879 = vmatpush1.msra.mxu0 0.0
        %880 = vmatprep.subr.mxu0 0.0
        %881 = vmatpush1.msra.mxu0 0.0
        %882 = vmatprep.subr.mxu0 0.0
        %883 = vmatpush1.msra.mxu0 0.0
        %884 = vmatprep.subr.mxu0 0.0
        %885 = vmatpush1.msra.mxu0 0.0
        %886 = vmatprep.subr.mxu0 0.0
        %887 = vmatpush1.msra.mxu0 0.0
        %888 = vmatprep.subr.mxu0 0.0
        %889 = vmatpush1.msra.mxu0 0.0
        %890 = vmatprep.subr.mxu0 0.0
        %891 = vmatpush1.msra.mxu0 0.0
        %892 = vmatprep.subr.mxu0 0.0
        %893 = vmatpush1.msra.mxu0 0.0
        %894 = vmatprep.mubr.f32.mxu0 0.0
        %895 = vmatmul.mubr.f32.gmra.mrb[0].mxu0 %v548
        %v896 = vpop.f32.mrb[0].mxu0
        %v897 = vadd.f32 0.0, %v896
        %v898 = vpop.f32.mrb[0].mxu0
        %899 = vdwg.mxu0
        %900 = vmatprep.subr.mxu0 0.0
        %901 = vmatpush1.msra.mxu0 %v515
        %902 = vmatprep.subr.mxu0 0.0
        %903 = vmatpush1.msra.mxu0 %v516
        %904 = vmatprep.subr.mxu0 0.0
        %905 = vmatpush1.msra.mxu0 %v517
        %906 = vmatprep.subr.mxu0 0.0
        %907 = vmatpush1.msra.mxu0 %v518
        %908 = vmatprep.subr.mxu0 0.0
        %909 = vmatpush1.msra.mxu0 0.0
        %910 = vmatprep.subr.mxu0 0.0
        %911 = vmatpush1.msra.mxu0 0.0
        %912 = vmatprep.subr.mxu0 0.0
        %913 = vmatpush1.msra.mxu0 0.0
        %914 = vmatprep.subr.mxu0 0.0
        %915 = vmatpush1.msra.mxu0 0.0
        %916 = vmatprep.subr.mxu0 0.0
        %917 = vmatpush1.msra.mxu0 0.0
        %918 = vmatprep.subr.mxu0 0.0
        %919 = vmatpush1.msra.mxu0 0.0
        %920 = vmatprep.subr.mxu0 0.0
        %921 = vmatpush1.msra.mxu0 0.0
        %922 = vmatprep.subr.mxu0 0.0
        %923 = vmatpush1.msra.mxu0 0.0
        %924 = vmatprep.subr.mxu0 0.0
        %925 = vmatpush1.msra.mxu0 0.0
        %926 = vmatprep.subr.mxu0 0.0
        %927 = vmatpush1.msra.mxu0 0.0
        %928 = vmatprep.subr.mxu0 0.0
        %929 = vmatpush1.msra.mxu0 0.0
        %930 = vmatprep.subr.mxu0 0.0
        %931 = vmatpush1.msra.mxu0 0.0
        %932 = vmatprep.subr.mxu0 0.0
        %933 = vmatpush1.msra.mxu0 0.0
        %934 = vmatprep.subr.mxu0 0.0
        %935 = vmatpush1.msra.mxu0 0.0
        %936 = vmatprep.subr.mxu0 0.0
        %937 = vmatpush1.msra.mxu0 0.0
        %938 = vmatprep.subr.mxu0 0.0
        %939 = vmatpush1.msra.mxu0 0.0
        %940 = vmatprep.subr.mxu0 0.0
        %941 = vmatpush1.msra.mxu0 0.0
        %942 = vmatprep.subr.mxu0 0.0
        %943 = vmatpush1.msra.mxu0 0.0
        %944 = vmatprep.subr.mxu0 0.0
        %945 = vmatpush1.msra.mxu0 0.0
        %946 = vmatprep.subr.mxu0 0.0
        %947 = vmatpush1.msra.mxu0 0.0
        %948 = vmatprep.subr.mxu0 0.0
        %949 = vmatpush1.msra.mxu0 0.0
        %950 = vmatprep.subr.mxu0 0.0
        %951 = vmatpush1.msra.mxu0 0.0
        %952 = vmatprep.subr.mxu0 0.0
        %953 = vmatpush1.msra.mxu0 0.0
        %954 = vmatprep.subr.mxu0 0.0
        %955 = vmatpush1.msra.mxu0 0.0
        %956 = vmatprep.subr.mxu0 0.0
        %957 = vmatpush1.msra.mxu0 0.0
        %958 = vmatprep.subr.mxu0 0.0
        %959 = vmatpush1.msra.mxu0 0.0
        %960 = vmatprep.subr.mxu0 0.0
        %961 = vmatpush1.msra.mxu0 0.0
        %962 = vmatprep.subr.mxu0 0.0
        %963 = vmatpush1.msra.mxu0 0.0
        %964 = vmatprep.mubr.f32.mxu0 0.0
        %965 = vmatmul.mubr.f32.gmra.mrb[0].mxu0 %v548
        %v966 = vpop.f32.mrb[0].mxu0
        %v967 = vadd.f32 0.0, %v966
        %v968 = vpop.f32.mrb[0].mxu0
        %969 = vdwg.mxu0
        %970 = vmatprep.subr.mxu0 0.0
        %971 = vmatpush1.msra.mxu0 %v519
        %972 = vmatprep.subr.mxu0 0.0
        %973 = vmatpush1.msra.mxu0 %v520
        %974 = vmatprep.subr.mxu0 0.0
        %975 = vmatpush1.msra.mxu0 %v521
        %976 = vmatprep.subr.mxu0 0.0
        %977 = vmatpush1.msra.mxu0 %v522
        %978 = vmatprep.subr.mxu0 0.0
        %979 = vmatpush1.msra.mxu0 0.0
        %980 = vmatprep.subr.mxu0 0.0
        %981 = vmatpush1.msra.mxu0 0.0
        %982 = vmatprep.subr.mxu0 0.0
        %983 = vmatpush1.msra.mxu0 0.0
        %984 = vmatprep.subr.mxu0 0.0
        %985 = vmatpush1.msra.mxu0 0.0
        %986 = vmatprep.subr.mxu0 0.0
        %987 = vmatpush1.msra.mxu0 0.0
        %988 = vmatprep.subr.mxu0 0.0
        %989 = vmatpush1.msra.mxu0 0.0
        %990 = vmatprep.subr.mxu0 0.0
        %991 = vmatpush1.msra.mxu0 0.0
        %992 = vmatprep.subr.mxu0 0.0
        %993 = vmatpush1.msra.mxu0 0.0
        %994 = vmatprep.subr.mxu0 0.0
        %995 = vmatpush1.msra.mxu0 0.0
        %996 = vmatprep.subr.mxu0 0.0
        %997 = vmatpush1.msra.mxu0 0.0
        %998 = vmatprep.subr.mxu0 0.0
        %999 = vmatpush1.msra.mxu0 0.0
        %1000 = vmatprep.subr.mxu0 0.0
        %1001 = vmatpush1.msra.mxu0 0.0
        %1002 = vmatprep.subr.mxu0 0.0
        %1003 = vmatpush1.msra.mxu0 0.0
        %1004 = vmatprep.subr.mxu0 0.0
        %1005 = vmatpush1.msra.mxu0 0.0
        %1006 = vmatprep.subr.mxu0 0.0
        %1007 = vmatpush1.msra.mxu0 0.0
        %1008 = vmatprep.subr.mxu0 0.0
        %1009 = vmatpush1.msra.mxu0 0.0
        %1010 = vmatprep.subr.mxu0 0.0
        %1011 = vmatpush1.msra.mxu0 0.0
        %1012 = vmatprep.subr.mxu0 0.0
        %1013 = vmatpush1.msra.mxu0 0.0
        %1014 = vmatprep.subr.mxu0 0.0
        %1015 = vmatpush1.msra.mxu0 0.0
        %1016 = vmatprep.subr.mxu0 0.0
        %1017 = vmatpush1.msra.mxu0 0.0
        %1018 = vmatprep.subr.mxu0 0.0
        %1019 = vmatpush1.msra.mxu0 0.0
        %1020 = vmatprep.subr.mxu0 0.0
        %1021 = vmatpush1.msra.mxu0 0.0
        %1022 = vmatprep.subr.mxu0 0.0
        %1023 = vmatpush1.msra.mxu0 0.0
        %1024 = vmatprep.subr.mxu0 0.0
        %1025 = vmatpush1.msra.mxu0 0.0
        %1026 = vmatprep.subr.mxu0 0.0
        %1027 = vmatpush1.msra.mxu0 0.0
        %1028 = vmatprep.subr.mxu0 0.0
        %1029 = vmatpush1.msra.mxu0 0.0
        %1030 = vmatprep.subr.mxu0 0.0
        %1031 = vmatpush1.msra.mxu0 0.0
        %1032 = vmatprep.subr.mxu0 0.0
        %1033 = vmatpush1.msra.mxu0 0.0
        %1034 = vmatprep.mubr.f32.mxu0 0.0
        %1035 = vmatmul.mubr.f32.gmra.mrb[0].mxu0 %v548
        %v1036 = vpop.f32.mrb[0].mxu0
        %v1037 = vadd.f32 0.0, %v1036
        %v1038 = vpop.f32.mrb[0].mxu0
        %1039 = vdwg.mxu0
        %1040 = vmatprep.subr.mxu0 0.0
        %1041 = vmatpush1.msra.mxu0 %v523
        %1042 = vmatprep.subr.mxu0 0.0
        %1043 = vmatpush1.msra.mxu0 %v524
        %1044 = vmatprep.subr.mxu0 0.0
        %1045 = vmatpush1.msra.mxu0 %v525
        %1046 = vmatprep.subr.mxu0 0.0
        %1047 = vmatpush1.msra.mxu0 %v526
        %1048 = vmatprep.subr.mxu0 0.0
        %1049 = vmatpush1.msra.mxu0 0.0
        %1050 = vmatprep.subr.mxu0 0.0
        %1051 = vmatpush1.msra.mxu0 0.0
        %1052 = vmatprep.subr.mxu0 0.0
        %1053 = vmatpush1.msra.mxu0 0.0
        %1054 = vmatprep.subr.mxu0 0.0
        %1055 = vmatpush1.msra.mxu0 0.0
        %1056 = vmatprep.subr.mxu0 0.0
        %1057 = vmatpush1.msra.mxu0 0.0
        %1058 = vmatprep.subr.mxu0 0.0
        %1059 = vmatpush1.msra.mxu0 0.0
        %1060 = vmatprep.subr.mxu0 0.0
        %1061 = vmatpush1.msra.mxu0 0.0
        %1062 = vmatprep.subr.mxu0 0.0
        %1063 = vmatpush1.msra.mxu0 0.0
        %1064 = vmatprep.subr.mxu0 0.0
        %1065 = vmatpush1.msra.mxu0 0.0
        %1066 = vmatprep.subr.mxu0 0.0
        %1067 = vmatpush1.msra.mxu0 0.0
        %1068 = vmatprep.subr.mxu0 0.0
        %1069 = vmatpush1.msra.mxu0 0.0
        %1070 = vmatprep.subr.mxu0 0.0
        %1071 = vmatpush1.msra.mxu0 0.0
        %1072 = vmatprep.subr.mxu0 0.0
        %1073 = vmatpush1.msra.mxu0 0.0
        %1074 = vmatprep.subr.mxu0 0.0
        %1075 = vmatpush1.msra.mxu0 0.0
        %1076 = vmatprep.subr.mxu0 0.0
        %1077 = vmatpush1.msra.mxu0 0.0
        %1078 = vmatprep.subr.mxu0 0.0
        %1079 = vmatpush1.msra.mxu0 0.0
        %1080 = vmatprep.subr.mxu0 0.0
        %1081 = vmatpush1.msra.mxu0 0.0
        %1082 = vmatprep.subr.mxu0 0.0
        %1083 = vmatpush1.msra.mxu0 0.0
        %1084 = vmatprep.subr.mxu0 0.0
        %1085 = vmatpush1.msra.mxu0 0.0
        %1086 = vmatprep.subr.mxu0 0.0
        %1087 = vmatpush1.msra.mxu0 0.0
        %1088 = vmatprep.subr.mxu0 0.0
        %1089 = vmatpush1.msra.mxu0 0.0
        %1090 = vmatprep.subr.mxu0 0.0
        %1091 = vmatpush1.msra.mxu0 0.0
        %1092 = vmatprep.subr.mxu0 0.0
        %1093 = vmatpush1.msra.mxu0 0.0
        %1094 = vmatprep.subr.mxu0 0.0
        %1095 = vmatpush1.msra.mxu0 0.0
        %1096 = vmatprep.subr.mxu0 0.0
        %1097 = vmatpush1.msra.mxu0 0.0
        %1098 = vmatprep.subr.mxu0 0.0
        %1099 = vmatpush1.msra.mxu0 0.0
        %1100 = vmatprep.subr.mxu0 0.0
        %1101 = vmatpush1.msra.mxu0 0.0
        %1102 = vmatprep.subr.mxu0 0.0
        %1103 = vmatpush1.msra.mxu0 0.0
        %1104 = vmatprep.mubr.f32.mxu0 0.0
        %1105 = vmatmul.mubr.f32.gmra.mrb[0].mxu0 %v548
        %v1106 = vpop.f32.mrb[0].mxu0
        %v1107 = vadd.f32 0.0, %v1106
        %v1108 = vpop.f32.mrb[0].mxu0
        %1109 = vdwg.mxu0
        %1110 = vmatprep.subr.mxu0 0.0
        %1111 = vmatpush1.msra.mxu0 %v527
        %1112 = vmatprep.subr.mxu0 0.0
        %1113 = vmatpush1.msra.mxu0 %v528
        %1114 = vmatprep.subr.mxu0 0.0
        %1115 = vmatpush1.msra.mxu0 %v529
        %1116 = vmatprep.subr.mxu0 0.0
        %1117 = vmatpush1.msra.mxu0 %v530
        %1118 = vmatprep.subr.mxu0 0.0
        %1119 = vmatpush1.msra.mxu0 0.0
        %1120 = vmatprep.subr.mxu0 0.0
        %1121 = vmatpush1.msra.mxu0 0.0
        %1122 = vmatprep.subr.mxu0 0.0
        %1123 = vmatpush1.msra.mxu0 0.0
        %1124 = vmatprep.subr.mxu0 0.0
        %1125 = vmatpush1.msra.mxu0 0.0
        %1126 = vmatprep.subr.mxu0 0.0
        %1127 = vmatpush1.msra.mxu0 0.0
        %1128 = vmatprep.subr.mxu0 0.0
        %1129 = vmatpush1.msra.mxu0 0.0
        %1130 = vmatprep.subr.mxu0 0.0
        %1131 = vmatpush1.msra.mxu0 0.0
        %1132 = vmatprep.subr.mxu0 0.0
        %1133 = vmatpush1.msra.mxu0 0.0
        %1134 = vmatprep.subr.mxu0 0.0
        %1135 = vmatpush1.msra.mxu0 0.0
        %1136 = vmatprep.subr.mxu0 0.0
        %1137 = vmatpush1.msra.mxu0 0.0
        %1138 = vmatprep.subr.mxu0 0.0
        %1139 = vmatpush1.msra.mxu0 0.0
        %1140 = vmatprep.subr.mxu0 0.0
        %1141 = vmatpush1.msra.mxu0 0.0
        %1142 = vmatprep.subr.mxu0 0.0
        %1143 = vmatpush1.msra.mxu0 0.0
        %1144 = vmatprep.subr.mxu0 0.0
        %1145 = vmatpush1.msra.mxu0 0.0
        %1146 = vmatprep.subr.mxu0 0.0
        %1147 = vmatpush1.msra.mxu0 0.0
        %1148 = vmatprep.subr.mxu0 0.0
        %1149 = vmatpush1.msra.mxu0 0.0
        %1150 = vmatprep.subr.mxu0 0.0
        %1151 = vmatpush1.msra.mxu0 0.0
        %1152 = vmatprep.subr.mxu0 0.0
        %1153 = vmatpush1.msra.mxu0 0.0
        %1154 = vmatprep.subr.mxu0 0.0
        %1155 = vmatpush1.msra.mxu0 0.0
        %1156 = vmatprep.subr.mxu0 0.0
        %1157 = vmatpush1.msra.mxu0 0.0
        %1158 = vmatprep.subr.mxu0 0.0
        %1159 = vmatpush1.msra.mxu0 0.0
        %1160 = vmatprep.subr.mxu0 0.0
        %1161 = vmatpush1.msra.mxu0 0.0
        %1162 = vmatprep.subr.mxu0 0.0
        %1163 = vmatpush1.msra.mxu0 0.0
        %1164 = vmatprep.subr.mxu0 0.0
        %1165 = vmatpush1.msra.mxu0 0.0
        %1166 = vmatprep.subr.mxu0 0.0
        %1167 = vmatpush1.msra.mxu0 0.0
        %1168 = vmatprep.subr.mxu0 0.0
        %1169 = vmatpush1.msra.mxu0 0.0
        %1170 = vmatprep.subr.mxu0 0.0
        %1171 = vmatpush1.msra.mxu0 0.0
        %1172 = vmatprep.subr.mxu0 0.0
        %1173 = vmatpush1.msra.mxu0 0.0
        %1174 = vmatprep.mubr.f32.mxu0 0.0
        %1175 = vmatmul.mubr.f32.gmra.mrb[0].mxu0 %v548
        %v1176 = vpop.f32.mrb[0].mxu0
        %v1177 = vadd.f32 0.0, %v1176
        %v1178 = vpop.f32.mrb[0].mxu0
        %1179 = vdwg.mxu0
        %1180 = vmatprep.subr.mxu0 0.0
        %1181 = vmatpush1.msra.mxu0 %v531
        %1182 = vmatprep.subr.mxu0 0.0
        %1183 = vmatpush1.msra.mxu0 %v532
        %1184 = vmatprep.subr.mxu0 0.0
        %1185 = vmatpush1.msra.mxu0 %v533
        %1186 = vmatprep.subr.mxu0 0.0
        %1187 = vmatpush1.msra.mxu0 %v534
        %1188 = vmatprep.subr.mxu0 0.0
        %1189 = vmatpush1.msra.mxu0 0.0
        %1190 = vmatprep.subr.mxu0 0.0
        %1191 = vmatpush1.msra.mxu0 0.0
        %1192 = vmatprep.subr.mxu0 0.0
        %1193 = vmatpush1.msra.mxu0 0.0
        %1194 = vmatprep.subr.mxu0 0.0
        %1195 = vmatpush1.msra.mxu0 0.0
        %1196 = vmatprep.subr.mxu0 0.0
        %1197 = vmatpush1.msra.mxu0 0.0
        %1198 = vmatprep.subr.mxu0 0.0
        %1199 = vmatpush1.msra.mxu0 0.0
        %1200 = vmatprep.subr.mxu0 0.0
        %1201 = vmatpush1.msra.mxu0 0.0
        %1202 = vmatprep.subr.mxu0 0.0
        %1203 = vmatpush1.msra.mxu0 0.0
        %1204 = vmatprep.subr.mxu0 0.0
        %1205 = vmatpush1.msra.mxu0 0.0
        %1206 = vmatprep.subr.mxu0 0.0
        %1207 = vmatpush1.msra.mxu0 0.0
        %1208 = vmatprep.subr.mxu0 0.0
        %1209 = vmatpush1.msra.mxu0 0.0
        %1210 = vmatprep.subr.mxu0 0.0
        %1211 = vmatpush1.msra.mxu0 0.0
        %1212 = vmatprep.subr.mxu0 0.0
        %1213 = vmatpush1.msra.mxu0 0.0
        %1214 = vmatprep.subr.mxu0 0.0
        %1215 = vmatpush1.msra.mxu0 0.0
        %1216 = vmatprep.subr.mxu0 0.0
        %1217 = vmatpush1.msra.mxu0 0.0
        %1218 = vmatprep.subr.mxu0 0.0
        %1219 = vmatpush1.msra.mxu0 0.0
        %1220 = vmatprep.subr.mxu0 0.0
        %1221 = vmatpush1.msra.mxu0 0.0
        %1222 = vmatprep.subr.mxu0 0.0
        %1223 = vmatpush1.msra.mxu0 0.0
        %1224 = vmatprep.subr.mxu0 0.0
        %1225 = vmatpush1.msra.mxu0 0.0
        %1226 = vmatprep.subr.mxu0 0.0
        %1227 = vmatpush1.msra.mxu0 0.0
        %1228 = vmatprep.subr.mxu0 0.0
        %1229 = vmatpush1.msra.mxu0 0.0
        %1230 = vmatprep.subr.mxu0 0.0
        %1231 = vmatpush1.msra.mxu0 0.0
        %1232 = vmatprep.subr.mxu0 0.0
        %1233 = vmatpush1.msra.mxu0 0.0
        %1234 = vmatprep.subr.mxu0 0.0
        %1235 = vmatpush1.msra.mxu0 0.0
        %1236 = vmatprep.subr.mxu0 0.0
        %1237 = vmatpush1.msra.mxu0 0.0
        %1238 = vmatprep.subr.mxu0 0.0
        %1239 = vmatpush1.msra.mxu0 0.0
        %1240 = vmatprep.subr.mxu0 0.0
        %1241 = vmatpush1.msra.mxu0 0.0
        %1242 = vmatprep.subr.mxu0 0.0
        %1243 = vmatpush1.msra.mxu0 0.0
        %1244 = vmatprep.mubr.f32.mxu0 0.0
        %1245 = vmatmul.mubr.f32.gmra.mrb[0].mxu0 %v548
        %v1246 = vpop.f32.mrb[0].mxu0
        %v1247 = vadd.f32 0.0, %v1246
        %v1248 = vpop.f32.mrb[0].mxu0
        %1249 = vdwg.mxu0
        %1250 = vmatprep.subr.mxu0 0.0
        %1251 = vmatpush1.msra.mxu0 %v535
        %1252 = vmatprep.subr.mxu0 0.0
        %1253 = vmatpush1.msra.mxu0 %v536
        %1254 = vmatprep.subr.mxu0 0.0
        %1255 = vmatpush1.msra.mxu0 %v537
        %1256 = vmatprep.subr.mxu0 0.0
        %1257 = vmatpush1.msra.mxu0 %v538
        %1258 = vmatprep.subr.mxu0 0.0
        %1259 = vmatpush1.msra.mxu0 0.0
        %1260 = vmatprep.subr.mxu0 0.0
        %1261 = vmatpush1.msra.mxu0 0.0
        %1262 = vmatprep.subr.mxu0 0.0
        %1263 = vmatpush1.msra.mxu0 0.0
        %1264 = vmatprep.subr.mxu0 0.0
        %1265 = vmatpush1.msra.mxu0 0.0
        %1266 = vmatprep.subr.mxu0 0.0
        %1267 = vmatpush1.msra.mxu0 0.0
        %1268 = vmatprep.subr.mxu0 0.0
        %1269 = vmatpush1.msra.mxu0 0.0
        %1270 = vmatprep.subr.mxu0 0.0
        %1271 = vmatpush1.msra.mxu0 0.0
        %1272 = vmatprep.subr.mxu0 0.0
        %1273 = vmatpush1.msra.mxu0 0.0
        %1274 = vmatprep.subr.mxu0 0.0
        %1275 = vmatpush1.msra.mxu0 0.0
        %1276 = vmatprep.subr.mxu0 0.0
        %1277 = vmatpush1.msra.mxu0 0.0
        %1278 = vmatprep.subr.mxu0 0.0
        %1279 = vmatpush1.msra.mxu0 0.0
        %1280 = vmatprep.subr.mxu0 0.0
        %1281 = vmatpush1.msra.mxu0 0.0
        %1282 = vmatprep.subr.mxu0 0.0
        %1283 = vmatpush1.msra.mxu0 0.0
        %1284 = vmatprep.subr.mxu0 0.0
        %1285 = vmatpush1.msra.mxu0 0.0
        %1286 = vmatprep.subr.mxu0 0.0
        %1287 = vmatpush1.msra.mxu0 0.0
        %1288 = vmatprep.subr.mxu0 0.0
        %1289 = vmatpush1.msra.mxu0 0.0
        %1290 = vmatprep.subr.mxu0 0.0
        %1291 = vmatpush1.msra.mxu0 0.0
        %1292 = vmatprep.subr.mxu0 0.0
        %1293 = vmatpush1.msra.mxu0 0.0
        %1294 = vmatprep.subr.mxu0 0.0
        %1295 = vmatpush1.msra.mxu0 0.0
        %1296 = vmatprep.subr.mxu0 0.0
        %1297 = vmatpush1.msra.mxu0 0.0
        %1298 = vmatprep.subr.mxu0 0.0
        %1299 = vmatpush1.msra.mxu0 0.0
        %1300 = vmatprep.subr.mxu0 0.0
        %1301 = vmatpush1.msra.mxu0 0.0
        %1302 = vmatprep.subr.mxu0 0.0
        %1303 = vmatpush1.msra.mxu0 0.0
        %1304 = vmatprep.subr.mxu0 0.0
        %1305 = vmatpush1.msra.mxu0 0.0
        %1306 = vmatprep.subr.mxu0 0.0
        %1307 = vmatpush1.msra.mxu0 0.0
        %1308 = vmatprep.subr.mxu0 0.0
        %1309 = vmatpush1.msra.mxu0 0.0
        %1310 = vmatprep.subr.mxu0 0.0
        %1311 = vmatpush1.msra.mxu0 0.0
        %1312 = vmatprep.subr.mxu0 0.0
        %1313 = vmatpush1.msra.mxu0 0.0
        %1314 = vmatprep.mubr.f32.mxu0 0.0
        %1315 = vmatmul.mubr.f32.gmra.mrb[0].mxu0 %v548
        %v1316 = vpop.f32.mrb[0].mxu0
        %v1317 = vadd.f32 0.0, %v1316
        %v1318 = vpop.f32.mrb[0].mxu0
        %1319 = vdwg.mxu0
        %1320 = vmatprep.subr.mxu0 0.0
        %1321 = vmatpush1.msra.mxu0 %v539
        %1322 = vmatprep.subr.mxu0 0.0
        %1323 = vmatpush1.msra.mxu0 %v540
        %1324 = vmatprep.subr.mxu0 0.0
        %1325 = vmatpush1.msra.mxu0 %v541
        %1326 = vmatprep.subr.mxu0 0.0
        %1327 = vmatpush1.msra.mxu0 %v542
        %1328 = vmatprep.subr.mxu0 0.0
        %1329 = vmatpush1.msra.mxu0 0.0
        %1330 = vmatprep.subr.mxu0 0.0
        %1331 = vmatpush1.msra.mxu0 0.0
        %1332 = vmatprep.subr.mxu0 0.0
        %1333 = vmatpush1.msra.mxu0 0.0
        %1334 = vmatprep.subr.mxu0 0.0
        %1335 = vmatpush1.msra.mxu0 0.0
        %1336 = vmatprep.subr.mxu0 0.0
        %1337 = vmatpush1.msra.mxu0 0.0
        %1338 = vmatprep.subr.mxu0 0.0
        %1339 = vmatpush1.msra.mxu0 0.0
        %1340 = vmatprep.subr.mxu0 0.0
        %1341 = vmatpush1.msra.mxu0 0.0
        %1342 = vmatprep.subr.mxu0 0.0
        %1343 = vmatpush1.msra.mxu0 0.0
        %1344 = vmatprep.subr.mxu0 0.0
        %1345 = vmatpush1.msra.mxu0 0.0
        %1346 = vmatprep.subr.mxu0 0.0
        %1347 = vmatpush1.msra.mxu0 0.0
        %1348 = vmatprep.subr.mxu0 0.0
        %1349 = vmatpush1.msra.mxu0 0.0
        %1350 = vmatprep.subr.mxu0 0.0
        %1351 = vmatpush1.msra.mxu0 0.0
        %1352 = vmatprep.subr.mxu0 0.0
        %1353 = vmatpush1.msra.mxu0 0.0
        %1354 = vmatprep.subr.mxu0 0.0
        %1355 = vmatpush1.msra.mxu0 0.0
        %1356 = vmatprep.subr.mxu0 0.0
        %1357 = vmatpush1.msra.mxu0 0.0
        %1358 = vmatprep.subr.mxu0 0.0
        %1359 = vmatpush1.msra.mxu0 0.0
        %1360 = vmatprep.subr.mxu0 0.0
        %1361 = vmatpush1.msra.mxu0 0.0
        %1362 = vmatprep.subr.mxu0 0.0
        %1363 = vmatpush1.msra.mxu0 0.0
        %1364 = vmatprep.subr.mxu0 0.0
        %1365 = vmatpush1.msra.mxu0 0.0
        %1366 = vmatprep.subr.mxu0 0.0
        %1367 = vmatpush1.msra.mxu0 0.0
        %1368 = vmatprep.subr.mxu0 0.0
        %1369 = vmatpush1.msra.mxu0 0.0
        %1370 = vmatprep.subr.mxu0 0.0
        %1371 = vmatpush1.msra.mxu0 0.0
        %1372 = vmatprep.subr.mxu0 0.0
        %1373 = vmatpush1.msra.mxu0 0.0
        %1374 = vmatprep.subr.mxu0 0.0
        %1375 = vmatpush1.msra.mxu0 0.0
        %1376 = vmatprep.subr.mxu0 0.0
        %1377 = vmatpush1.msra.mxu0 0.0
        %1378 = vmatprep.subr.mxu0 0.0
        %1379 = vmatpush1.msra.mxu0 0.0
        %1380 = vmatprep.subr.mxu0 0.0
        %1381 = vmatpush1.msra.mxu0 0.0
        %1382 = vmatprep.subr.mxu0 0.0
        %1383 = vmatpush1.msra.mxu0 0.0
        %1384 = vmatprep.mubr.f32.mxu0 0.0
        %1385 = vmatmul.mubr.f32.gmra.mrb[0].mxu0 %v548
        %v1386 = vpop.f32.mrb[0].mxu0
        %v1387 = vadd.f32 0.0, %v1386
        %v1388 = vpop.f32.mrb[0].mxu0
        %1389 = vdwg.mxu0
        %vm1390 = vcmask 64512
        %v1392 = vsel %vm1390, %v617, 0
        %v1395 = vsel %vm1390, %v897, 0
        %1397 = vmatprep.subr.mxu0 0.0
        %1398 = vmatpush1.xpose.msra.mxu0 %v1395
        %1399 = vmatprep.subr.mxu0 0.0
        %1400 = vmatpush1.xpose.msra.mxu0 0.0
        %1401 = vmatprep.subr.mxu0 0.0
        %1402 = vmatpush1.xpose.msra.mxu0 0.0
        %1403 = vmatprep.subr.mxu0 0.0
        %1404 = vmatpush1.xpose.msra.mxu0 0.0
        %1405 = vmatprep.subr.mxu0 0.0
        %1406 = vmatpush1.xpose.msra.mxu0 0.0
        %1407 = vmatprep.subr.mxu0 0.0
        %1408 = vmatpush1.xpose.msra.mxu0 0.0
        %1409 = vmatprep.subr.mxu0 0.0
        %1410 = vmatpush1.xpose.msra.mxu0 0.0
        %1411 = vmatprep.subr.mxu0 0.0
        %1412 = vmatpush1.xpose.msra.mxu0 0.0
        %1413 = vmatprep.subr.mxu0 0.0
        %1414 = vmatpush1.xpose.msra.mxu0 0.0
        %1415 = vmatprep.subr.mxu0 0.0
        %1416 = vmatpush1.xpose.msra.mxu0 0.0
        %1417 = vmatprep.subr.mxu0 0.0
        %1418 = vmatpush1.xpose.msra.mxu0 0.0
        %1419 = vmatprep.subr.mxu0 0.0
        %1420 = vmatpush1.xpose.msra.mxu0 0.0
        %1421 = vmatprep.subr.mxu0 0.0
        %1422 = vmatpush1.xpose.msra.mxu0 0.0
        %1423 = vmatprep.subr.mxu0 0.0
        %1424 = vmatpush1.xpose.msra.mxu0 0.0
        %1425 = vmatprep.subr.mxu0 0.0
        %1426 = vmatpush1.xpose.msra.mxu0 0.0
        %1427 = vmatprep.subr.mxu0 0.0
        %1428 = vmatpush1.xpose.msra.mxu0 0.0
        %1429 = vmatprep.subr.mxu0 0.0
        %1430 = vmatpush1.xpose.msra.mxu0 0.0
        %1431 = vmatprep.subr.mxu0 0.0
        %1432 = vmatpush1.xpose.msra.mxu0 0.0
        %1433 = vmatprep.subr.mxu0 0.0
        %1434 = vmatpush1.xpose.msra.mxu0 0.0
        %1435 = vmatprep.subr.mxu0 0.0
        %1436 = vmatpush1.xpose.msra.mxu0 0.0
        %1437 = vmatprep.subr.mxu0 0.0
        %1438 = vmatpush1.xpose.msra.mxu0 0.0
        %1439 = vmatprep.subr.mxu0 0.0
        %1440 = vmatpush1.xpose.msra.mxu0 0.0
        %1441 = vmatprep.subr.mxu0 0.0
        %1442 = vmatpush1.xpose.msra.mxu0 0.0
        %1443 = vmatprep.subr.mxu0 0.0
        %1444 = vmatpush1.xpose.msra.mxu0 0.0
        %1445 = vmatprep.subr.mxu0 0.0
        %1446 = vmatpush1.xpose.msra.mxu0 0.0
        %1447 = vmatprep.subr.mxu0 0.0
        %1448 = vmatpush1.xpose.msra.mxu0 0.0
        %1449 = vmatprep.subr.mxu0 0.0
        %1450 = vmatpush1.xpose.msra.mxu0 0.0
        %1451 = vmatprep.subr.mxu0 0.0
        %1452 = vmatpush1.xpose.msra.mxu0 0.0
        %1453 = vmatprep.subr.mxu0 0.0
        %1454 = vmatpush1.xpose.msra.mxu0 0.0
        %1455 = vmatprep.subr.mxu0 0.0
        %1456 = vmatpush1.xpose.msra.mxu0 0.0
        %1457 = vmatprep.subr.mxu0 0.0
        %1458 = vmatpush1.xpose.msra.mxu0 0.0
        %1459 = vmatprep.subr.mxu0 0.0
        %1460 = vmatpush1.xpose.msra.mxu0 0.0
        %1461 = vmatprep.mubr.f32.mxu0 0.0
        %1462 = vmatmul.mubr.f32.gmra.mrb[0].mxu0 %v1392
        %v1463 = vpop.f32.mrb[0].mxu0
        %v1464 = vadd.f32 0.0, %v1463
        %v1465 = vpop.f32.mrb[0].mxu0
        %1466 = vdwg.mxu0
        %v1468 = vsel %vm1390, %v687, 0
        %v1471 = vsel %vm1390, %v967, 0
        %1473 = vmatprep.subr.mxu0 0.0
        %1474 = vmatpush1.xpose.msra.mxu0 %v1471
        %1475 = vmatprep.subr.mxu0 0.0
        %1476 = vmatpush1.xpose.msra.mxu0 0.0
        %1477 = vmatprep.subr.mxu0 0.0
        %1478 = vmatpush1.xpose.msra.mxu0 0.0
        %1479 = vmatprep.subr.mxu0 0.0
        %1480 = vmatpush1.xpose.msra.mxu0 0.0
        %1481 = vmatprep.subr.mxu0 0.0
        %1482 = vmatpush1.xpose.msra.mxu0 0.0
        %1483 = vmatprep.subr.mxu0 0.0
        %1484 = vmatpush1.xpose.msra.mxu0 0.0
        %1485 = vmatprep.subr.mxu0 0.0
        %1486 = vmatpush1.xpose.msra.mxu0 0.0
        %1487 = vmatprep.subr.mxu0 0.0
        %1488 = vmatpush1.xpose.msra.mxu0 0.0
        %1489 = vmatprep.subr.mxu0 0.0
        %1490 = vmatpush1.xpose.msra.mxu0 0.0
        %1491 = vmatprep.subr.mxu0 0.0
        %1492 = vmatpush1.xpose.msra.mxu0 0.0
        %1493 = vmatprep.subr.mxu0 0.0
        %1494 = vmatpush1.xpose.msra.mxu0 0.0
        %1495 = vmatprep.subr.mxu0 0.0
        %1496 = vmatpush1.xpose.msra.mxu0 0.0
        %1497 = vmatprep.subr.mxu0 0.0
        %1498 = vmatpush1.xpose.msra.mxu0 0.0
        %1499 = vmatprep.subr.mxu0 0.0
        %1500 = vmatpush1.xpose.msra.mxu0 0.0
        %1501 = vmatprep.subr.mxu0 0.0
        %1502 = vmatpush1.xpose.msra.mxu0 0.0
        %1503 = vmatprep.subr.mxu0 0.0
        %1504 = vmatpush1.xpose.msra.mxu0 0.0
        %1505 = vmatprep.subr.mxu0 0.0
        %1506 = vmatpush1.xpose.msra.mxu0 0.0
        %1507 = vmatprep.subr.mxu0 0.0
        %1508 = vmatpush1.xpose.msra.mxu0 0.0
        %1509 = vmatprep.subr.mxu0 0.0
        %1510 = vmatpush1.xpose.msra.mxu0 0.0
        %1511 = vmatprep.subr.mxu0 0.0
        %1512 = vmatpush1.xpose.msra.mxu0 0.0
        %1513 = vmatprep.subr.mxu0 0.0
        %1514 = vmatpush1.xpose.msra.mxu0 0.0
        %1515 = vmatprep.subr.mxu0 0.0
        %1516 = vmatpush1.xpose.msra.mxu0 0.0
        %1517 = vmatprep.subr.mxu0 0.0
        %1518 = vmatpush1.xpose.msra.mxu0 0.0
        %1519 = vmatprep.subr.mxu0 0.0
        %1520 = vmatpush1.xpose.msra.mxu0 0.0
        %1521 = vmatprep.subr.mxu0 0.0
        %1522 = vmatpush1.xpose.msra.mxu0 0.0
        %1523 = vmatprep.subr.mxu0 0.0
        %1524 = vmatpush1.xpose.msra.mxu0 0.0
        %1525 = vmatprep.subr.mxu0 0.0
        %1526 = vmatpush1.xpose.msra.mxu0 0.0
        %1527 = vmatprep.subr.mxu0 0.0
        %1528 = vmatpush1.xpose.msra.mxu0 0.0
        %1529 = vmatprep.subr.mxu0 0.0
        %1530 = vmatpush1.xpose.msra.mxu0 0.0
        %1531 = vmatprep.subr.mxu0 0.0
        %1532 = vmatpush1.xpose.msra.mxu0 0.0
        %1533 = vmatprep.subr.mxu0 0.0
        %1534 = vmatpush1.xpose.msra.mxu0 0.0
        %1535 = vmatprep.subr.mxu0 0.0
        %1536 = vmatpush1.xpose.msra.mxu0 0.0
        %1537 = vmatprep.mubr.f32.mxu0 0.0
        %1538 = vmatmul.mubr.f32.gmra.mrb[0].mxu0 %v1468
        %v1539 = vpop.f32.mrb[0].mxu0
        %v1540 = vadd.f32 0.0, %v1539
        %v1541 = vpop.f32.mrb[0].mxu0
        %1542 = vdwg.mxu0
        %v1544 = vsel %vm1390, %v757, 0
        %v1547 = vsel %vm1390, %v1037, 0
        %1549 = vmatprep.subr.mxu0 0.0
        %1550 = vmatpush1.xpose.msra.mxu0 %v1547
        %1551 = vmatprep.subr.mxu0 0.0
        %1552 = vmatpush1.xpose.msra.mxu0 0.0
        %1553 = vmatprep.subr.mxu0 0.0
        %1554 = vmatpush1.xpose.msra.mxu0 0.0
        %1555 = vmatprep.subr.mxu0 0.0
        %1556 = vmatpush1.xpose.msra.mxu0 0.0
        %1557 = vmatprep.subr.mxu0 0.0
        %1558 = vmatpush1.xpose.msra.mxu0 0.0
        %1559 = vmatprep.subr.mxu0 0.0
        %1560 = vmatpush1.xpose.msra.mxu0 0.0
        %1561 = vmatprep.subr.mxu0 0.0
        %1562 = vmatpush1.xpose.msra.mxu0 0.0
        %1563 = vmatprep.subr.mxu0 0.0
        %1564 = vmatpush1.xpose.msra.mxu0 0.0
        %1565 = vmatprep.subr.mxu0 0.0
        %1566 = vmatpush1.xpose.msra.mxu0 0.0
        %1567 = vmatprep.subr.mxu0 0.0
        %1568 = vmatpush1.xpose.msra.mxu0 0.0
        %1569 = vmatprep.subr.mxu0 0.0
        %1570 = vmatpush1.xpose.msra.mxu0 0.0
        %1571 = vmatprep.subr.mxu0 0.0
        %1572 = vmatpush1.xpose.msra.mxu0 0.0
        %1573 = vmatprep.subr.mxu0 0.0
        %1574 = vmatpush1.xpose.msra.mxu0 0.0
        %1575 = vmatprep.subr.mxu0 0.0
        %1576 = vmatpush1.xpose.msra.mxu0 0.0
        %1577 = vmatprep.subr.mxu0 0.0
        %1578 = vmatpush1.xpose.msra.mxu0 0.0
        %1579 = vmatprep.subr.mxu0 0.0
        %1580 = vmatpush1.xpose.msra.mxu0 0.0
        %1581 = vmatprep.subr.mxu0 0.0
        %1582 = vmatpush1.xpose.msra.mxu0 0.0
        %1583 = vmatprep.subr.mxu0 0.0
        %1584 = vmatpush1.xpose.msra.mxu0 0.0
        %1585 = vmatprep.subr.mxu0 0.0
        %1586 = vmatpush1.xpose.msra.mxu0 0.0
        %1587 = vmatprep.subr.mxu0 0.0
        %1588 = vmatpush1.xpose.msra.mxu0 0.0
        %1589 = vmatprep.subr.mxu0 0.0
        %1590 = vmatpush1.xpose.msra.mxu0 0.0
        %1591 = vmatprep.subr.mxu0 0.0
        %1592 = vmatpush1.xpose.msra.mxu0 0.0
        %1593 = vmatprep.subr.mxu0 0.0
        %1594 = vmatpush1.xpose.msra.mxu0 0.0
        %1595 = vmatprep.subr.mxu0 0.0
        %1596 = vmatpush1.xpose.msra.mxu0 0.0
        %1597 = vmatprep.subr.mxu0 0.0
        %1598 = vmatpush1.xpose.msra.mxu0 0.0
        %1599 = vmatprep.subr.mxu0 0.0
        %1600 = vmatpush1.xpose.msra.mxu0 0.0
        %1601 = vmatprep.subr.mxu0 0.0
        %1602 = vmatpush1.xpose.msra.mxu0 0.0
        %1603 = vmatprep.subr.mxu0 0.0
        %1604 = vmatpush1.xpose.msra.mxu0 0.0
        %1605 = vmatprep.subr.mxu0 0.0
        %1606 = vmatpush1.xpose.msra.mxu0 0.0
        %1607 = vmatprep.subr.mxu0 0.0
        %1608 = vmatpush1.xpose.msra.mxu0 0.0
        %1609 = vmatprep.subr.mxu0 0.0
        %1610 = vmatpush1.xpose.msra.mxu0 0.0
        %1611 = vmatprep.subr.mxu0 0.0
        %1612 = vmatpush1.xpose.msra.mxu0 0.0
        %1613 = vmatprep.mubr.f32.mxu0 0.0
        %1614 = vmatmul.mubr.f32.gmra.mrb[0].mxu0 %v1544
        %v1615 = vpop.f32.mrb[0].mxu0
        %v1616 = vadd.f32 0.0, %v1615
        %v1617 = vpop.f32.mrb[0].mxu0
        %1618 = vdwg.mxu0
        %v1620 = vsel %vm1390, %v827, 0
        %v1623 = vsel %vm1390, %v1107, 0
        %1625 = vmatprep.subr.mxu0 0.0
        %1626 = vmatpush1.xpose.msra.mxu0 %v1623
        %1627 = vmatprep.subr.mxu0 0.0
        %1628 = vmatpush1.xpose.msra.mxu0 0.0
        %1629 = vmatprep.subr.mxu0 0.0
        %1630 = vmatpush1.xpose.msra.mxu0 0.0
        %1631 = vmatprep.subr.mxu0 0.0
        %1632 = vmatpush1.xpose.msra.mxu0 0.0
        %1633 = vmatprep.subr.mxu0 0.0
        %1634 = vmatpush1.xpose.msra.mxu0 0.0
        %1635 = vmatprep.subr.mxu0 0.0
        %1636 = vmatpush1.xpose.msra.mxu0 0.0
        %1637 = vmatprep.subr.mxu0 0.0
        %1638 = vmatpush1.xpose.msra.mxu0 0.0
        %1639 = vmatprep.subr.mxu0 0.0
        %1640 = vmatpush1.xpose.msra.mxu0 0.0
        %1641 = vmatprep.subr.mxu0 0.0
        %1642 = vmatpush1.xpose.msra.mxu0 0.0
        %1643 = vmatprep.subr.mxu0 0.0
        %1644 = vmatpush1.xpose.msra.mxu0 0.0
        %1645 = vmatprep.subr.mxu0 0.0
        %1646 = vmatpush1.xpose.msra.mxu0 0.0
        %1647 = vmatprep.subr.mxu0 0.0
        %1648 = vmatpush1.xpose.msra.mxu0 0.0
        %1649 = vmatprep.subr.mxu0 0.0
        %1650 = vmatpush1.xpose.msra.mxu0 0.0
        %1651 = vmatprep.subr.mxu0 0.0
        %1652 = vmatpush1.xpose.msra.mxu0 0.0
        %1653 = vmatprep.subr.mxu0 0.0
        %1654 = vmatpush1.xpose.msra.mxu0 0.0
        %1655 = vmatprep.subr.mxu0 0.0
        %1656 = vmatpush1.xpose.msra.mxu0 0.0
        %1657 = vmatprep.subr.mxu0 0.0
        %1658 = vmatpush1.xpose.msra.mxu0 0.0
        %1659 = vmatprep.subr.mxu0 0.0
        %1660 = vmatpush1.xpose.msra.mxu0 0.0
        %1661 = vmatprep.subr.mxu0 0.0
        %1662 = vmatpush1.xpose.msra.mxu0 0.0
        %1663 = vmatprep.subr.mxu0 0.0
        %1664 = vmatpush1.xpose.msra.mxu0 0.0
        %1665 = vmatprep.subr.mxu0 0.0
        %1666 = vmatpush1.xpose.msra.mxu0 0.0
        %1667 = vmatprep.subr.mxu0 0.0
        %1668 = vmatpush1.xpose.msra.mxu0 0.0
        %1669 = vmatprep.subr.mxu0 0.0
        %1670 = vmatpush1.xpose.msra.mxu0 0.0
        %1671 = vmatprep.subr.mxu0 0.0
        %1672 = vmatpush1.xpose.msra.mxu0 0.0
        %1673 = vmatprep.subr.mxu0 0.0
        %1674 = vmatpush1.xpose.msra.mxu0 0.0
        %1675 = vmatprep.subr.mxu0 0.0
        %1676 = vmatpush1.xpose.msra.mxu0 0.0
        %1677 = vmatprep.subr.mxu0 0.0
        %1678 = vmatpush1.xpose.msra.mxu0 0.0
        %1679 = vmatprep.subr.mxu0 0.0
        %1680 = vmatpush1.xpose.msra.mxu0 0.0
        %1681 = vmatprep.subr.mxu0 0.0
        %1682 = vmatpush1.xpose.msra.mxu0 0.0
        %1683 = vmatprep.subr.mxu0 0.0
        %1684 = vmatpush1.xpose.msra.mxu0 0.0
        %1685 = vmatprep.subr.mxu0 0.0
        %1686 = vmatpush1.xpose.msra.mxu0 0.0
        %1687 = vmatprep.subr.mxu0 0.0
        %1688 = vmatpush1.xpose.msra.mxu0 0.0
        %1689 = vmatprep.mubr.f32.mxu0 0.0
        %1690 = vmatmul.mubr.f32.gmra.mrb[0].mxu0 %v1620
        %v1691 = vpop.f32.mrb[0].mxu0
        %v1692 = vadd.f32 0.0, %v1691
        %v1693 = vpop.f32.mrb[0].mxu0
        %1694 = vdwg.mxu0
        %v1695 = vmul.f32 %v1464, 0.35355338
        %v1696 = vmul.f32 %v1540, 0.35355338
        %v1697 = vmul.f32 %v1616, 0.35355338
        %v1698 = vmul.f32 %v1692, 0.35355338
        %v1699 = vsel %vm1390, %v1695, -inf
        %1700 = vmax.xlane.f32.xlu0 %v1699
        %v1701 = vpop.xlane.xlu0 %1700
        %v1702 = vsel %vm1390, %v1696, -inf
        %1703 = vmax.xlane.f32.xlu0 %v1702
        %v1704 = vpop.xlane.xlu0 %1703
        %v1705 = vsel %vm1390, %v1697, -inf
        %1706 = vmax.xlane.f32.xlu0 %v1705
        %v1707 = vpop.xlane.xlu0 %1706
        %v1708 = vsel %vm1390, %v1698, -inf
        %1709 = vmax.xlane.f32.xlu0 %v1708
        %v1710 = vpop.xlane.xlu0 %1709
        %v1711 = vsub.f32 %v1695, %v1701
        %v1712 = vsub.f32 %v1696, %v1704
        %v1713 = vsub.f32 %v1697, %v1707
        %v1714 = vsub.f32 %v1698, %v1710
        %v1715 = vmul.f32 %v1711, 1.442695
        %v1716 = vpow.pop %v1715
        %v1717 = vmul.f32 %v1712, 1.442695
        %v1718 = vpow.pop %v1717
        %v1719 = vmul.f32 %v1713, 1.442695
        %v1720 = vpow.pop %v1719
        %v1721 = vmul.f32 %v1714, 1.442695
        %v1722 = vpow.pop %v1721
        %v1723 = vsel %vm1390, %v1716, 0.0
        %1724 = vadd.xlane.f32.xlu0 %v1723
        %v1725 = vpop.xlane.xlu0 %1724
        %v1726 = vsel %vm1390, %v1718, 0.0
        %1727 = vadd.xlane.f32.xlu0 %v1726
        %v1728 = vpop.xlane.xlu0 %1727
        %v1729 = vsel %vm1390, %v1720, 0.0
        %1730 = vadd.xlane.f32.xlu0 %v1729
        %v1731 = vpop.xlane.xlu0 %1730
        %v1732 = vsel %vm1390, %v1722, 0.0
        %1733 = vadd.xlane.f32.xlu0 %v1732
        %v1734 = vpop.xlane.xlu0 %1733
        %v1735 = vrcp.pop %v1725
        %v1736 = vrcp.pop %v1728
        %v1737 = vrcp.pop %v1731
        %v1738 = vrcp.pop %v1734
        %v1739 = vmul.f32 %v1716, %v1735
        %v1740 = vmul.f32 %v1718, %v1736
        %v1741 = vmul.f32 %v1720, %v1737
        %v1742 = vmul.f32 %v1722, %v1738
        %v1744 = vsel %vm1390, %v1739, 0
        %1746 = vmatprep.subr.mxu0 0.0
        %1747 = vmatpush1.msra.mxu0 %v1177
        %1748 = vmatprep.subr.mxu0 0.0
        %1749 = vmatpush1.msra.mxu0 0.0
        %1750 = vmatprep.subr.mxu0 0.0
        %1751 = vmatpush1.msra.mxu0 0.0
        %1752 = vmatprep.subr.mxu0 0.0
        %1753 = vmatpush1.msra.mxu0 0.0
        %1754 = vmatprep.subr.mxu0 0.0
        %1755 = vmatpush1.msra.mxu0 0.0
        %1756 = vmatprep.subr.mxu0 0.0
        %1757 = vmatpush1.msra.mxu0 0.0
        %1758 = vmatprep.subr.mxu0 0.0
        %1759 = vmatpush1.msra.mxu0 0.0
        %1760 = vmatprep.subr.mxu0 0.0
        %1761 = vmatpush1.msra.mxu0 0.0
        %1762 = vmatprep.subr.mxu0 0.0
        %1763 = vmatpush1.msra.mxu0 0.0
        %1764 = vmatprep.subr.mxu0 0.0
        %1765 = vmatpush1.msra.mxu0 0.0
        %1766 = vmatprep.subr.mxu0 0.0
        %1767 = vmatpush1.msra.mxu0 0.0
        %1768 = vmatprep.subr.mxu0 0.0
        %1769 = vmatpush1.msra.mxu0 0.0
        %1770 = vmatprep.subr.mxu0 0.0
        %1771 = vmatpush1.msra.mxu0 0.0
        %1772 = vmatprep.subr.mxu0 0.0
        %1773 = vmatpush1.msra.mxu0 0.0
        %1774 = vmatprep.subr.mxu0 0.0
        %1775 = vmatpush1.msra.mxu0 0.0
        %1776 = vmatprep.subr.mxu0 0.0
        %1777 = vmatpush1.msra.mxu0 0.0
        %1778 = vmatprep.subr.mxu0 0.0
        %1779 = vmatpush1.msra.mxu0 0.0
        %1780 = vmatprep.subr.mxu0 0.0
        %1781 = vmatpush1.msra.mxu0 0.0
        %1782 = vmatprep.subr.mxu0 0.0
        %1783 = vmatpush1.msra.mxu0 0.0
        %1784 = vmatprep.subr.mxu0 0.0
        %1785 = vmatpush1.msra.mxu0 0.0
        %1786 = vmatprep.subr.mxu0 0.0
        %1787 = vmatpush1.msra.mxu0 0.0
        %1788 = vmatprep.subr.mxu0 0.0
        %1789 = vmatpush1.msra.mxu0 0.0
        %1790 = vmatprep.subr.mxu0 0.0
        %1791 = vmatpush1.msra.mxu0 0.0
        %1792 = vmatprep.subr.mxu0 0.0
        %1793 = vmatpush1.msra.mxu0 0.0
        %1794 = vmatprep.subr.mxu0 0.0
        %1795 = vmatpush1.msra.mxu0 0.0
        %1796 = vmatprep.subr.mxu0 0.0
        %1797 = vmatpush1.msra.mxu0 0.0
        %1798 = vmatprep.subr.mxu0 0.0
        %1799 = vmatpush1.msra.mxu0 0.0
        %1800 = vmatprep.subr.mxu0 0.0
        %1801 = vmatpush1.msra.mxu0 0.0
        %1802 = vmatprep.subr.mxu0 0.0
        %1803 = vmatpush1.msra.mxu0 0.0
        %1804 = vmatprep.subr.mxu0 0.0
        %1805 = vmatpush1.msra.mxu0 0.0
        %1806 = vmatprep.subr.mxu0 0.0
        %1807 = vmatpush1.msra.mxu0 0.0
        %1808 = vmatprep.subr.mxu0 0.0
        %1809 = vmatpush1.msra.mxu0 0.0
        %1810 = vmatprep.mubr.f32.mxu0 0.0
        %1811 = vmatmul.mubr.f32.gmra.mrb[0].mxu0 %v1744
        %v1812 = vpop.f32.mrb[0].mxu0
        %v1813 = vadd.f32 0.0, %v1812
        %v1814 = vpop.f32.mrb[0].mxu0
        %1815 = vdwg.mxu0
        %v1817 = vsel %vm1390, %v1740, 0
        %1819 = vmatprep.subr.mxu0 0.0
        %1820 = vmatpush1.msra.mxu0 %v1247
        %1821 = vmatprep.subr.mxu0 0.0
        %1822 = vmatpush1.msra.mxu0 0.0
        %1823 = vmatprep.subr.mxu0 0.0
        %1824 = vmatpush1.msra.mxu0 0.0
        %1825 = vmatprep.subr.mxu0 0.0
        %1826 = vmatpush1.msra.mxu0 0.0
        %1827 = vmatprep.subr.mxu0 0.0
        %1828 = vmatpush1.msra.mxu0 0.0
        %1829 = vmatprep.subr.mxu0 0.0
        %1830 = vmatpush1.msra.mxu0 0.0
        %1831 = vmatprep.subr.mxu0 0.0
        %1832 = vmatpush1.msra.mxu0 0.0
        %1833 = vmatprep.subr.mxu0 0.0
        %1834 = vmatpush1.msra.mxu0 0.0
        %1835 = vmatprep.subr.mxu0 0.0
        %1836 = vmatpush1.msra.mxu0 0.0
        %1837 = vmatprep.subr.mxu0 0.0
        %1838 = vmatpush1.msra.mxu0 0.0
        %1839 = vmatprep.subr.mxu0 0.0
        %1840 = vmatpush1.msra.mxu0 0.0
        %1841 = vmatprep.subr.mxu0 0.0
        %1842 = vmatpush1.msra.mxu0 0.0
        %1843 = vmatprep.subr.mxu0 0.0
        %1844 = vmatpush1.msra.mxu0 0.0
        %1845 = vmatprep.subr.mxu0 0.0
        %1846 = vmatpush1.msra.mxu0 0.0
        %1847 = vmatprep.subr.mxu0 0.0
        %1848 = vmatpush1.msra.mxu0 0.0
        %1849 = vmatprep.subr.mxu0 0.0
        %1850 = vmatpush1.msra.mxu0 0.0
        %1851 = vmatprep.subr.mxu0 0.0
        %1852 = vmatpush1.msra.mxu0 0.0
        %1853 = vmatprep.subr.mxu0 0.0
        %1854 = vmatpush1.msra.mxu0 0.0
        %1855 = vmatprep.subr.mxu0 0.0
        %1856 = vmatpush1.msra.mxu0 0.0
        %1857 = vmatprep.subr.mxu0 0.0
        %1858 = vmatpush1.msra.mxu0 0.0
        %1859 = vmatprep.subr.mxu0 0.0
        %1860 = vmatpush1.msra.mxu0 0.0
        %1861 = vmatprep.subr.mxu0 0.0
        %1862 = vmatpush1.msra.mxu0 0.0
        %1863 = vmatprep.subr.mxu0 0.0
        %1864 = vmatpush1.msra.mxu0 0.0
        %1865 = vmatprep.subr.mxu0 0.0
        %1866 = vmatpush1.msra.mxu0 0.0
        %1867 = vmatprep.subr.mxu0 0.0
        %1868 = vmatpush1.msra.mxu0 0.0
        %1869 = vmatprep.subr.mxu0 0.0
        %1870 = vmatpush1.msra.mxu0 0.0
        %1871 = vmatprep.subr.mxu0 0.0
        %1872 = vmatpush1.msra.mxu0 0.0
        %1873 = vmatprep.subr.mxu0 0.0
        %1874 = vmatpush1.msra.mxu0 0.0
        %1875 = vmatprep.subr.mxu0 0.0
        %1876 = vmatpush1.msra.mxu0 0.0
        %1877 = vmatprep.subr.mxu0 0.0
        %1878 = vmatpush1.msra.mxu0 0.0
        %1879 = vmatprep.subr.mxu0 0.0
        %1880 = vmatpush1.msra.mxu0 0.0
        %1881 = vmatprep.subr.mxu0 0.0
        %1882 = vmatpush1.msra.mxu0 0.0
        %1883 = vmatprep.mubr.f32.mxu0 0.0
        %1884 = vmatmul.mubr.f32.gmra.mrb[0].mxu0 %v1817
        %v1885 = vpop.f32.mrb[0].mxu0
        %v1886 = vadd.f32 0.0, %v1885
        %v1887 = vpop.f32.mrb[0].mxu0
        %1888 = vdwg.mxu0
        %v1890 = vsel %vm1390, %v1741, 0
        %1892 = vmatprep.subr.mxu0 0.0
        %1893 = vmatpush1.msra.mxu0 %v1317
        %1894 = vmatprep.subr.mxu0 0.0
        %1895 = vmatpush1.msra.mxu0 0.0
        %1896 = vmatprep.subr.mxu0 0.0
        %1897 = vmatpush1.msra.mxu0 0.0
        %1898 = vmatprep.subr.mxu0 0.0
        %1899 = vmatpush1.msra.mxu0 0.0
        %1900 = vmatprep.subr.mxu0 0.0
        %1901 = vmatpush1.msra.mxu0 0.0
        %1902 = vmatprep.subr.mxu0 0.0
        %1903 = vmatpush1.msra.mxu0 0.0
        %1904 = vmatprep.subr.mxu0 0.0
        %1905 = vmatpush1.msra.mxu0 0.0
        %1906 = vmatprep.subr.mxu0 0.0
        %1907 = vmatpush1.msra.mxu0 0.0
        %1908 = vmatprep.subr.mxu0 0.0
        %1909 = vmatpush1.msra.mxu0 0.0
        %1910 = vmatprep.subr.mxu0 0.0
        %1911 = vmatpush1.msra.mxu0 0.0
        %1912 = vmatprep.subr.mxu0 0.0
        %1913 = vmatpush1.msra.mxu0 0.0
        %1914 = vmatprep.subr.mxu0 0.0
        %1915 = vmatpush1.msra.mxu0 0.0
        %1916 = vmatprep.subr.mxu0 0.0
        %1917 = vmatpush1.msra.mxu0 0.0
        %1918 = vmatprep.subr.mxu0 0.0
        %1919 = vmatpush1.msra.mxu0 0.0
        %1920 = vmatprep.subr.mxu0 0.0
        %1921 = vmatpush1.msra.mxu0 0.0
        %1922 = vmatprep.subr.mxu0 0.0
        %1923 = vmatpush1.msra.mxu0 0.0
        %1924 = vmatprep.subr.mxu0 0.0
        %1925 = vmatpush1.msra.mxu0 0.0
        %1926 = vmatprep.subr.mxu0 0.0
        %1927 = vmatpush1.msra.mxu0 0.0
        %1928 = vmatprep.subr.mxu0 0.0
        %1929 = vmatpush1.msra.mxu0 0.0
        %1930 = vmatprep.subr.mxu0 0.0
        %1931 = vmatpush1.msra.mxu0 0.0
        %1932 = vmatprep.subr.mxu0 0.0
        %1933 = vmatpush1.msra.mxu0 0.0
        %1934 = vmatprep.subr.mxu0 0.0
        %1935 = vmatpush1.msra.mxu0 0.0
        %1936 = vmatprep.subr.mxu0 0.0
        %1937 = vmatpush1.msra.mxu0 0.0
        %1938 = vmatprep.subr.mxu0 0.0
        %1939 = vmatpush1.msra.mxu0 0.0
        %1940 = vmatprep.subr.mxu0 0.0
        %1941 = vmatpush1.msra.mxu0 0.0
        %1942 = vmatprep.subr.mxu0 0.0
        %1943 = vmatpush1.msra.mxu0 0.0
        %1944 = vmatprep.subr.mxu0 0.0
        %1945 = vmatpush1.msra.mxu0 0.0
        %1946 = vmatprep.subr.mxu0 0.0
        %1947 = vmatpush1.msra.mxu0 0.0
        %1948 = vmatprep.subr.mxu0 0.0
        %1949 = vmatpush1.msra.mxu0 0.0
        %1950 = vmatprep.subr.mxu0 0.0
        %1951 = vmatpush1.msra.mxu0 0.0
        %1952 = vmatprep.subr.mxu0 0.0
        %1953 = vmatpush1.msra.mxu0 0.0
        %1954 = vmatprep.subr.mxu0 0.0
        %1955 = vmatpush1.msra.mxu0 0.0
        %1956 = vmatprep.mubr.f32.mxu0 0.0
        %1957 = vmatmul.mubr.f32.gmra.mrb[0].mxu0 %v1890
        %v1958 = vpop.f32.mrb[0].mxu0
        %v1959 = vadd.f32 0.0, %v1958
        %v1960 = vpop.f32.mrb[0].mxu0
        %1961 = vdwg.mxu0
        %v1963 = vsel %vm1390, %v1742, 0
        %1965 = vmatprep.subr.mxu0 0.0
        %1966 = vmatpush1.msra.mxu0 %v1387
        %1967 = vmatprep.subr.mxu0 0.0
        %1968 = vmatpush1.msra.mxu0 0.0
        %1969 = vmatprep.subr.mxu0 0.0
        %1970 = vmatpush1.msra.mxu0 0.0
        %1971 = vmatprep.subr.mxu0 0.0
        %1972 = vmatpush1.msra.mxu0 0.0
        %1973 = vmatprep.subr.mxu0 0.0
        %1974 = vmatpush1.msra.mxu0 0.0
        %1975 = vmatprep.subr.mxu0 0.0
        %1976 = vmatpush1.msra.mxu0 0.0
        %1977 = vmatprep.subr.mxu0 0.0
        %1978 = vmatpush1.msra.mxu0 0.0
        %1979 = vmatprep.subr.mxu0 0.0
        %1980 = vmatpush1.msra.mxu0 0.0
        %1981 = vmatprep.subr.mxu0 0.0
        %1982 = vmatpush1.msra.mxu0 0.0
        %1983 = vmatprep.subr.mxu0 0.0
        %1984 = vmatpush1.msra.mxu0 0.0
        %1985 = vmatprep.subr.mxu0 0.0
        %1986 = vmatpush1.msra.mxu0 0.0
        %1987 = vmatprep.subr.mxu0 0.0
        %1988 = vmatpush1.msra.mxu0 0.0
        %1989 = vmatprep.subr.mxu0 0.0
        %1990 = vmatpush1.msra.mxu0 0.0
        %1991 = vmatprep.subr.mxu0 0.0
        %1992 = vmatpush1.msra.mxu0 0.0
        %1993 = vmatprep.subr.mxu0 0.0
        %1994 = vmatpush1.msra.mxu0 0.0
        %1995 = vmatprep.subr.mxu0 0.0
        %1996 = vmatpush1.msra.mxu0 0.0
        %1997 = vmatprep.subr.mxu0 0.0
        %1998 = vmatpush1.msra.mxu0 0.0
        %1999 = vmatprep.subr.mxu0 0.0
        %2000 = vmatpush1.msra.mxu0 0.0
        %2001 = vmatprep.subr.mxu0 0.0
        %2002 = vmatpush1.msra.mxu0 0.0
        %2003 = vmatprep.subr.mxu0 0.0
        %2004 = vmatpush1.msra.mxu0 0.0
        %2005 = vmatprep.subr.mxu0 0.0
        %2006 = vmatpush1.msra.mxu0 0.0
        %2007 = vmatprep.subr.mxu0 0.0
        %2008 = vmatpush1.msra.mxu0 0.0
        %2009 = vmatprep.subr.mxu0 0.0
        %2010 = vmatpush1.msra.mxu0 0.0
        %2011 = vmatprep.subr.mxu0 0.0
        %2012 = vmatpush1.msra.mxu0 0.0
        %2013 = vmatprep.subr.mxu0 0.0
        %2014 = vmatpush1.msra.mxu0 0.0
        %2015 = vmatprep.subr.mxu0 0.0
        %2016 = vmatpush1.msra.mxu0 0.0
        %2017 = vmatprep.subr.mxu0 0.0
        %2018 = vmatpush1.msra.mxu0 0.0
        %2019 = vmatprep.subr.mxu0 0.0
        %2020 = vmatpush1.msra.mxu0 0.0
        %2021 = vmatprep.subr.mxu0 0.0
        %2022 = vmatpush1.msra.mxu0 0.0
        %2023 = vmatprep.subr.mxu0 0.0
        %2024 = vmatpush1.msra.mxu0 0.0
        %2025 = vmatprep.subr.mxu0 0.0
        %2026 = vmatpush1.msra.mxu0 0.0
        %2027 = vmatprep.subr.mxu0 0.0
        %2028 = vmatpush1.msra.mxu0 0.0
        %2029 = vmatprep.mubr.f32.mxu0 0.0
        %2030 = vmatmul.mubr.f32.gmra.mrb[0].mxu0 %v1963
        %v2031 = vpop.f32.mrb[0].mxu0
        %v2032 = vadd.f32 0.0, %v2031
        %v2033 = vpop.f32.mrb[0].mxu0
        %2034 = vdwg.mxu0
        %v2036 = vsel %vm1390, %v1813, 0
        %2038 = vmatprep.subr.mxu0 0.0
        %2039 = vmatpush1.msra.mxu0 %v543
        %2040 = vmatprep.subr.mxu0 0.0
        %2041 = vmatpush1.msra.mxu0 0.0
        %2042 = vmatprep.subr.mxu0 0.0
        %2043 = vmatpush1.msra.mxu0 0.0
        %2044 = vmatprep.subr.mxu0 0.0
        %2045 = vmatpush1.msra.mxu0 0.0
        %2046 = vmatprep.subr.mxu0 0.0
        %2047 = vmatpush1.msra.mxu0 0.0
        %2048 = vmatprep.subr.mxu0 0.0
        %2049 = vmatpush1.msra.mxu0 0.0
        %2050 = vmatprep.subr.mxu0 0.0
        %2051 = vmatpush1.msra.mxu0 0.0
        %2052 = vmatprep.subr.mxu0 0.0
        %2053 = vmatpush1.msra.mxu0 0.0
        %2054 = vmatprep.subr.mxu0 0.0
        %2055 = vmatpush1.msra.mxu0 0.0
        %2056 = vmatprep.subr.mxu0 0.0
        %2057 = vmatpush1.msra.mxu0 0.0
        %2058 = vmatprep.subr.mxu0 0.0
        %2059 = vmatpush1.msra.mxu0 0.0
        %2060 = vmatprep.subr.mxu0 0.0
        %2061 = vmatpush1.msra.mxu0 0.0
        %2062 = vmatprep.subr.mxu0 0.0
        %2063 = vmatpush1.msra.mxu0 0.0
        %2064 = vmatprep.subr.mxu0 0.0
        %2065 = vmatpush1.msra.mxu0 0.0
        %2066 = vmatprep.subr.mxu0 0.0
        %2067 = vmatpush1.msra.mxu0 0.0
        %2068 = vmatprep.subr.mxu0 0.0
        %2069 = vmatpush1.msra.mxu0 0.0
        %2070 = vmatprep.subr.mxu0 0.0
        %2071 = vmatpush1.msra.mxu0 0.0
        %2072 = vmatprep.subr.mxu0 0.0
        %2073 = vmatpush1.msra.mxu0 0.0
        %2074 = vmatprep.subr.mxu0 0.0
        %2075 = vmatpush1.msra.mxu0 0.0
        %2076 = vmatprep.subr.mxu0 0.0
        %2077 = vmatpush1.msra.mxu0 0.0
        %2078 = vmatprep.subr.mxu0 0.0
        %2079 = vmatpush1.msra.mxu0 0.0
        %2080 = vmatprep.subr.mxu0 0.0
        %2081 = vmatpush1.msra.mxu0 0.0
        %2082 = vmatprep.subr.mxu0 0.0
        %2083 = vmatpush1.msra.mxu0 0.0
        %2084 = vmatprep.subr.mxu0 0.0
        %2085 = vmatpush1.msra.mxu0 0.0
        %2086 = vmatprep.subr.mxu0 0.0
        %2087 = vmatpush1.msra.mxu0 0.0
        %2088 = vmatprep.subr.mxu0 0.0
        %2089 = vmatpush1.msra.mxu0 0.0
        %2090 = vmatprep.subr.mxu0 0.0
        %2091 = vmatpush1.msra.mxu0 0.0
        %2092 = vmatprep.subr.mxu0 0.0
        %2093 = vmatpush1.msra.mxu0 0.0
        %2094 = vmatprep.subr.mxu0 0.0
        %2095 = vmatpush1.msra.mxu0 0.0
        %2096 = vmatprep.subr.mxu0 0.0
        %2097 = vmatpush1.msra.mxu0 0.0
        %2098 = vmatprep.subr.mxu0 0.0
        %2099 = vmatpush1.msra.mxu0 0.0
        %2100 = vmatprep.subr.mxu0 0.0
        %2101 = vmatpush1.msra.mxu0 0.0
        %2102 = vmatprep.mubr.f32.mxu0 0.0
        %2103 = vmatmul.mubr.f32.gmra.mrb[0].mxu0 %v2036
        %v2104 = vpop.f32.mrb[0].mxu0
        %v2105 = vadd.f32 0.0, %v2104
        %v2106 = vpop.f32.mrb[0].mxu0
        %2107 = vdwg.mxu0
        %v2109 = vsel %vm1390, %v1886, 0
        %2111 = vmatprep.subr.mxu0 0.0
        %2112 = vmatpush1.msra.mxu0 %v544
        %2113 = vmatprep.subr.mxu0 0.0
        %2114 = vmatpush1.msra.mxu0 0.0
        %2115 = vmatprep.subr.mxu0 0.0
        %2116 = vmatpush1.msra.mxu0 0.0
        %2117 = vmatprep.subr.mxu0 0.0
        %2118 = vmatpush1.msra.mxu0 0.0
        %2119 = vmatprep.subr.mxu0 0.0
        %2120 = vmatpush1.msra.mxu0 0.0
        %2121 = vmatprep.subr.mxu0 0.0
        %2122 = vmatpush1.msra.mxu0 0.0
        %2123 = vmatprep.subr.mxu0 0.0
        %2124 = vmatpush1.msra.mxu0 0.0
        %2125 = vmatprep.subr.mxu0 0.0
        %2126 = vmatpush1.msra.mxu0 0.0
        %2127 = vmatprep.subr.mxu0 0.0
        %2128 = vmatpush1.msra.mxu0 0.0
        %2129 = vmatprep.subr.mxu0 0.0
        %2130 = vmatpush1.msra.mxu0 0.0
        %2131 = vmatprep.subr.mxu0 0.0
        %2132 = vmatpush1.msra.mxu0 0.0
        %2133 = vmatprep.subr.mxu0 0.0
        %2134 = vmatpush1.msra.mxu0 0.0
        %2135 = vmatprep.subr.mxu0 0.0
        %2136 = vmatpush1.msra.mxu0 0.0
        %2137 = vmatprep.subr.mxu0 0.0
        %2138 = vmatpush1.msra.mxu0 0.0
        %2139 = vmatprep.subr.mxu0 0.0
        %2140 = vmatpush1.msra.mxu0 0.0
        %2141 = vmatprep.subr.mxu0 0.0
        %2142 = vmatpush1.msra.mxu0 0.0
        %2143 = vmatprep.subr.mxu0 0.0
        %2144 = vmatpush1.msra.mxu0 0.0
        %2145 = vmatprep.subr.mxu0 0.0
        %2146 = vmatpush1.msra.mxu0 0.0
        %2147 = vmatprep.subr.mxu0 0.0
        %2148 = vmatpush1.msra.mxu0 0.0
        %2149 = vmatprep.subr.mxu0 0.0
        %2150 = vmatpush1.msra.mxu0 0.0
        %2151 = vmatprep.subr.mxu0 0.0
        %2152 = vmatpush1.msra.mxu0 0.0
        %2153 = vmatprep.subr.mxu0 0.0
        %2154 = vmatpush1.msra.mxu0 0.0
        %2155 = vmatprep.subr.mxu0 0.0
        %2156 = vmatpush1.msra.mxu0 0.0
        %2157 = vmatprep.subr.mxu0 0.0
        %2158 = vmatpush1.msra.mxu0 0.0
        %2159 = vmatprep.subr.mxu0 0.0
        %2160 = vmatpush1.msra.mxu0 0.0
        %2161 = vmatprep.subr.mxu0 0.0
        %2162 = vmatpush1.msra.mxu0 0.0
        %2163 = vmatprep.subr.mxu0 0.0
        %2164 = vmatpush1.msra.mxu0 0.0
        %2165 = vmatprep.subr.mxu0 0.0
        %2166 = vmatpush1.msra.mxu0 0.0
        %2167 = vmatprep.subr.mxu0 0.0
        %2168 = vmatpush1.msra.mxu0 0.0
        %2169 = vmatprep.subr.mxu0 0.0
        %2170 = vmatpush1.msra.mxu0 0.0
        %2171 = vmatprep.subr.mxu0 0.0
        %2172 = vmatpush1.msra.mxu0 0.0
        %2173 = vmatprep.subr.mxu0 0.0
        %2174 = vmatpush1.msra.mxu0 0.0
        %2175 = vmatprep.mubr.f32.mxu0 0.0
        %2176 = vmatmul.mubr.f32.gmra.mrb[0].mxu0 %v2109
        %v2177 = vpop.f32.mrb[0].mxu0
        %v2178 = vadd.f32 0.0, %v2177
        %v2179 = vpop.f32.mrb[0].mxu0
        %2180 = vdwg.mxu0
        %v2182 = vsel %vm1390, %v1959, 0
        %2184 = vmatprep.subr.mxu0 0.0
        %2185 = vmatpush1.msra.mxu0 %v545
        %2186 = vmatprep.subr.mxu0 0.0
        %2187 = vmatpush1.msra.mxu0 0.0
        %2188 = vmatprep.subr.mxu0 0.0
        %2189 = vmatpush1.msra.mxu0 0.0
        %2190 = vmatprep.subr.mxu0 0.0
        %2191 = vmatpush1.msra.mxu0 0.0
        %2192 = vmatprep.subr.mxu0 0.0
        %2193 = vmatpush1.msra.mxu0 0.0
        %2194 = vmatprep.subr.mxu0 0.0
        %2195 = vmatpush1.msra.mxu0 0.0
        %2196 = vmatprep.subr.mxu0 0.0
        %2197 = vmatpush1.msra.mxu0 0.0
        %2198 = vmatprep.subr.mxu0 0.0
        %2199 = vmatpush1.msra.mxu0 0.0
        %2200 = vmatprep.subr.mxu0 0.0
        %2201 = vmatpush1.msra.mxu0 0.0
        %2202 = vmatprep.subr.mxu0 0.0
        %2203 = vmatpush1.msra.mxu0 0.0
        %2204 = vmatprep.subr.mxu0 0.0
        %2205 = vmatpush1.msra.mxu0 0.0
        %2206 = vmatprep.subr.mxu0 0.0
        %2207 = vmatpush1.msra.mxu0 0.0
        %2208 = vmatprep.subr.mxu0 0.0
        %2209 = vmatpush1.msra.mxu0 0.0
        %2210 = vmatprep.subr.mxu0 0.0
        %2211 = vmatpush1.msra.mxu0 0.0
        %2212 = vmatprep.subr.mxu0 0.0
        %2213 = vmatpush1.msra.mxu0 0.0
        %2214 = vmatprep.subr.mxu0 0.0
        %2215 = vmatpush1.msra.mxu0 0.0
        %2216 = vmatprep.subr.mxu0 0.0
        %2217 = vmatpush1.msra.mxu0 0.0
        %2218 = vmatprep.subr.mxu0 0.0
        %2219 = vmatpush1.msra.mxu0 0.0
        %2220 = vmatprep.subr.mxu0 0.0
        %2221 = vmatpush1.msra.mxu0 0.0
        %2222 = vmatprep.subr.mxu0 0.0
        %2223 = vmatpush1.msra.mxu0 0.0
        %2224 = vmatprep.subr.mxu0 0.0
        %2225 = vmatpush1.msra.mxu0 0.0
        %2226 = vmatprep.subr.mxu0 0.0
        %2227 = vmatpush1.msra.mxu0 0.0
        %2228 = vmatprep.subr.mxu0 0.0
        %2229 = vmatpush1.msra.mxu0 0.0
        %2230 = vmatprep.subr.mxu0 0.0
        %2231 = vmatpush1.msra.mxu0 0.0
        %2232 = vmatprep.subr.mxu0 0.0
        %2233 = vmatpush1.msra.mxu0 0.0
        %2234 = vmatprep.subr.mxu0 0.0
        %2235 = vmatpush1.msra.mxu0 0.0
        %2236 = vmatprep.subr.mxu0 0.0
        %2237 = vmatpush1.msra.mxu0 0.0
        %2238 = vmatprep.subr.mxu0 0.0
        %2239 = vmatpush1.msra.mxu0 0.0
        %2240 = vmatprep.subr.mxu0 0.0
        %2241 = vmatpush1.msra.mxu0 0.0
        %2242 = vmatprep.subr.mxu0 0.0
        %2243 = vmatpush1.msra.mxu0 0.0
        %2244 = vmatprep.subr.mxu0 0.0
        %2245 = vmatpush1.msra.mxu0 0.0
        %2246 = vmatprep.subr.mxu0 0.0
        %2247 = vmatpush1.msra.mxu0 0.0
        %2248 = vmatprep.mubr.f32.mxu0 0.0
        %2249 = vmatmul.mubr.f32.gmra.mrb[0].mxu0 %v2182
        %v2250 = vpop.f32.mrb[0].mxu0
        %v2251 = vadd.f32 0.0, %v2250
        %v2252 = vpop.f32.mrb[0].mxu0
        %2253 = vdwg.mxu0
        %v2255 = vsel %vm1390, %v2032, 0
        %2257 = vmatprep.subr.mxu0 0.0
        %2258 = vmatpush1.msra.mxu0 %v546
        %2259 = vmatprep.subr.mxu0 0.0
        %2260 = vmatpush1.msra.mxu0 0.0
        %2261 = vmatprep.subr.mxu0 0.0
        %2262 = vmatpush1.msra.mxu0 0.0
        %2263 = vmatprep.subr.mxu0 0.0
        %2264 = vmatpush1.msra.mxu0 0.0
        %2265 = vmatprep.subr.mxu0 0.0
        %2266 = vmatpush1.msra.mxu0 0.0
        %2267 = vmatprep.subr.mxu0 0.0
        %2268 = vmatpush1.msra.mxu0 0.0
        %2269 = vmatprep.subr.mxu0 0.0
        %2270 = vmatpush1.msra.mxu0 0.0
        %2271 = vmatprep.subr.mxu0 0.0
        %2272 = vmatpush1.msra.mxu0 0.0
        %2273 = vmatprep.subr.mxu0 0.0
        %2274 = vmatpush1.msra.mxu0 0.0
        %2275 = vmatprep.subr.mxu0 0.0
        %2276 = vmatpush1.msra.mxu0 0.0
        %2277 = vmatprep.subr.mxu0 0.0
        %2278 = vmatpush1.msra.mxu0 0.0
        %2279 = vmatprep.subr.mxu0 0.0
        %2280 = vmatpush1.msra.mxu0 0.0
        %2281 = vmatprep.subr.mxu0 0.0
        %2282 = vmatpush1.msra.mxu0 0.0
        %2283 = vmatprep.subr.mxu0 0.0
        %2284 = vmatpush1.msra.mxu0 0.0
        %2285 = vmatprep.subr.mxu0 0.0
        %2286 = vmatpush1.msra.mxu0 0.0
        %2287 = vmatprep.subr.mxu0 0.0
        %2288 = vmatpush1.msra.mxu0 0.0
        %2289 = vmatprep.subr.mxu0 0.0
        %2290 = vmatpush1.msra.mxu0 0.0
        %2291 = vmatprep.subr.mxu0 0.0
        %2292 = vmatpush1.msra.mxu0 0.0
        %2293 = vmatprep.subr.mxu0 0.0
        %2294 = vmatpush1.msra.mxu0 0.0
        %2295 = vmatprep.subr.mxu0 0.0
        %2296 = vmatpush1.msra.mxu0 0.0
        %2297 = vmatprep.subr.mxu0 0.0
        %2298 = vmatpush1.msra.mxu0 0.0
        %2299 = vmatprep.subr.mxu0 0.0
        %2300 = vmatpush1.msra.mxu0 0.0
        %2301 = vmatprep.subr.mxu0 0.0
        %2302 = vmatpush1.msra.mxu0 0.0
        %2303 = vmatprep.subr.mxu0 0.0
        %2304 = vmatpush1.msra.mxu0 0.0
        %2305 = vmatprep.subr.mxu0 0.0
        %2306 = vmatpush1.msra.mxu0 0.0
        %2307 = vmatprep.subr.mxu0 0.0
        %2308 = vmatpush1.msra.mxu0 0.0
        %2309 = vmatprep.subr.mxu0 0.0
        %2310 = vmatpush1.msra.mxu0 0.0
        %2311 = vmatprep.subr.mxu0 0.0
        %2312 = vmatpush1.msra.mxu0 0.0
        %2313 = vmatprep.subr.mxu0 0.0
        %2314 = vmatpush1.msra.mxu0 0.0
        %2315 = vmatprep.subr.mxu0 0.0
        %2316 = vmatpush1.msra.mxu0 0.0
        %2317 = vmatprep.subr.mxu0 0.0
        %2318 = vmatpush1.msra.mxu0 0.0
        %2319 = vmatprep.subr.mxu0 0.0
        %2320 = vmatpush1.msra.mxu0 0.0
        %2321 = vmatprep.mubr.f32.mxu0 0.0
        %2322 = vmatmul.mubr.f32.gmra.mrb[0].mxu0 %v2255
        %v2323 = vpop.f32.mrb[0].mxu0
        %v2324 = vadd.f32 0.0, %v2323
        %v2325 = vpop.f32.mrb[0].mxu0
        %2326 = vdwg.mxu0
        %v2327 = vsel %vm466, %v2105, 0.0
        %v2328 = vsel %vm466, %v2178, 0.0
        %v2329 = vadd.f32 %v2327, %v2328
        %v2330 = vsel %vm466, %v2251, 0.0
        %v2331 = vadd.f32 %v2329, %v2330
        %v2332 = vsel %vm466, %v2324, 0.0
        %v2333 = vadd.f32 %v2331, %v2332
        %v2334 = vld [vmem:[%s7] sm:$0x1]
        %v2336 = vlaneseq
        %v2337 = vshrl.u32 %v2336, 7
        %v2338 = vsub.s32 0, %v2337
        %v2339 = vrot.slane %v2334, %v2338
        %v2341 = vadd.f32 %v2333, %v2339
        %v2342 = vmul.f32 %v463, 0.5
        %v2343 = vadd.f32 %v2341, %v2342
        %v2344 = vld [vmem:[%s8] sm:$0x1]
        %v2345 = vld [vmem:[%s9] sm:$0x1]
        %v2346 = vsel %vm466, %v2343, 0.0
        %2347 = vadd.xlane.f32.xlu0 %v2346
        %v2348 = vpop.xlane.xlu0 %2347
        %v2349 = vmul.f32 %v2348, %v470
        %v2350 = vsub.f32 %v2343, %v2349
        %v2351 = vmul.f32 %v2350, %v2350
        %v2352 = vsel %vm466, %v2351, 0.0
        %2353 = vadd.xlane.f32.xlu0 %v2352
        %v2354 = vpop.xlane.xlu0 %2353
        %v2355 = vmul.f32 %v2354, %v470
        %v2356 = vadd.f32 %v2355, 1e-05
        %v2357 = vrsqrt.pop %v2356
        %v2358 = vmul.f32 %v2350, %v2357
        %v2360 = vlaneseq
        %v2361 = vshrl.u32 %v2360, 7
        %v2362 = vsub.s32 0, %v2361
        %v2363 = vrot.slane %v2344, %v2362
        %v2365 = vmul.f32 %v2358, %v2363
        %v2367 = vlaneseq
        %v2368 = vshrl.u32 %v2367, 7
        %v2369 = vsub.s32 0, %v2368
        %v2370 = vrot.slane %v2345, %v2369
        %v2372 = vadd.f32 %v2365, %v2370
        %v2373 = vld [vmem:[%s10] sm:$0xff]
        %v2374 = vld [vmem:[%s10 + $0x8] sm:$0xff]
        %v2375 = vld [vmem:[%s10 + $0x10] sm:$0xff]
        %v2376 = vld [vmem:[%s10 + $0x18] sm:$0xff]
        %v2377 = vld [vmem:[%s11] sm:$0x1]
        %v2379 = vlaneseq
        %v2380 = vshrl.u32 %v2379, 7
        %v2381 = vsub.s32 0, %v2380
        %v2382 = vrot.slane %v2377, %v2381
        %v2385 = vsel %vm466, %v2372, 0
        %2387 = vmatprep.subr.mxu0 0.0
        %2388 = vmatpush1.msra.mxu0 %v2373
        %2389 = vmatprep.subr.mxu0 0.0
        %2390 = vmatpush1.msra.mxu0 %v2374
        %2391 = vmatprep.subr.mxu0 0.0
        %2392 = vmatpush1.msra.mxu0 %v2375
        %2393 = vmatprep.subr.mxu0 0.0
        %2394 = vmatpush1.msra.mxu0 %v2376
        %2395 = vmatprep.subr.mxu0 0.0
        %2396 = vmatpush1.msra.mxu0 0.0
        %2397 = vmatprep.subr.mxu0 0.0
        %2398 = vmatpush1.msra.mxu0 0.0
        %2399 = vmatprep.subr.mxu0 0.0
        %2400 = vmatpush1.msra.mxu0 0.0
        %2401 = vmatprep.subr.mxu0 0.0
        %2402 = vmatpush1.msra.mxu0 0.0
        %2403 = vmatprep.subr.mxu0 0.0
        %2404 = vmatpush1.msra.mxu0 0.0
        %2405 = vmatprep.subr.mxu0 0.0
        %2406 = vmatpush1.msra.mxu0 0.0
        %2407 = vmatprep.subr.mxu0 0.0
        %2408 = vmatpush1.msra.mxu0 0.0
        %2409 = vmatprep.subr.mxu0 0.0
        %2410 = vmatpush1.msra.mxu0 0.0
        %2411 = vmatprep.subr.mxu0 0.0
        %2412 = vmatpush1.msra.mxu0 0.0
        %2413 = vmatprep.subr.mxu0 0.0
        %2414 = vmatpush1.msra.mxu0 0.0
        %2415 = vmatprep.subr.mxu0 0.0
        %2416 = vmatpush1.msra.mxu0 0.0
        %2417 = vmatprep.subr.mxu0 0.0
        %2418 = vmatpush1.msra.mxu0 0.0
        %2419 = vmatprep.subr.mxu0 0.0
        %2420 = vmatpush1.msra.mxu0 0.0
        %2421 = vmatprep.subr.mxu0 0.0
        %2422 = vmatpush1.msra.mxu0 0.0
        %2423 = vmatprep.subr.mxu0 0.0
        %2424 = vmatpush1.msra.mxu0 0.0
        %2425 = vmatprep.subr.mxu0 0.0
        %2426 = vmatpush1.msra.mxu0 0.0
        %2427 = vmatprep.subr.mxu0 0.0
        %2428 = vmatpush1.msra.mxu0 0.0
        %2429 = vmatprep.subr.mxu0 0.0
        %2430 = vmatpush1.msra.mxu0 0.0
        %2431 = vmatprep.subr.mxu0 0.0
        %2432 = vmatpush1.msra.mxu0 0.0
        %2433 = vmatprep.subr.mxu0 0.0
        %2434 = vmatpush1.msra.mxu0 0.0
        %2435 = vmatprep.subr.mxu0 0.0
        %2436 = vmatpush1.msra.mxu0 0.0
        %2437 = vmatprep.subr.mxu0 0.0
        %2438 = vmatpush1.msra.mxu0 0.0
        %2439 = vmatprep.subr.mxu0 0.0
        %2440 = vmatpush1.msra.mxu0 0.0
        %2441 = vmatprep.subr.mxu0 0.0
        %2442 = vmatpush1.msra.mxu0 0.0
        %2443 = vmatprep.subr.mxu0 0.0
        %2444 = vmatpush1.msra.mxu0 0.0
        %2445 = vmatprep.subr.mxu0 0.0
        %2446 = vmatpush1.msra.mxu0 0.0
        %2447 = vmatprep.subr.mxu0 0.0
        %2448 = vmatpush1.msra.mxu0 0.0
        %2449 = vmatprep.subr.mxu0 0.0
        %2450 = vmatpush1.msra.mxu0 0.0
        %2451 = vmatprep.mubr.f32.mxu0 0.0
        %2452 = vmatmul.mubr.f32.gmra.mrb[0].mxu0 %v2385
        %v2453 = vpop.f32.mrb[0].mxu0
        %v2454 = vadd.f32 %v2382, %v2453
        %v2455 = vpop.f32.mrb[0].mxu0
        %2456 = vdwg.mxu0
        %v2457 = vmax.f32 %v2454, 0.0
        %v2458 = vld [vmem:[%s12] sm:$0xff]
        %v2459 = vld [vmem:[%s12 + $0x8] sm:$0xff]
        %v2460 = vld [vmem:[%s12 + $0x10] sm:$0xff]
        %v2461 = vld [vmem:[%s12 + $0x18] sm:$0xff]
        %v2462 = vld [vmem:[%s12 + $0x20] sm:$0xff]
        %v2463 = vld [vmem:[%s12 + $0x28] sm:$0xff]
        %v2464 = vld [vmem:[%s12 + $0x30] sm:$0xff]
        %v2465 = vld [vmem:[%s12 + $0x38] sm:$0xff]
        %v2466 = vld [vmem:[%s13] sm:$0x1]
        %v2468 = vlaneseq
        %v2469 = vshrl.u32 %v2468, 7
        %v2470 = vsub.s32 0, %v2469
        %v2471 = vrot.slane %v2466, %v2470
        %vm2473 = vcmask 523264
        %v2475 = vsel %vm2473, %v2457, 0
        %2477 = vmatprep.subr.mxu0 0.0
        %2478 = vmatpush1.msra.mxu0 %v2458
        %2479 = vmatprep.subr.mxu0 0.0
        %2480 = vmatpush1.msra.mxu0 %v2459
        %2481 = vmatprep.subr.mxu0 0.0
        %2482 = vmatpush1.msra.mxu0 %v2460
        %2483 = vmatprep.subr.mxu0 0.0
        %2484 = vmatpush1.msra.mxu0 %v2461
        %2485 = vmatprep.subr.mxu0 0.0
        %2486 = vmatpush1.msra.mxu0 %v2462
        %2487 = vmatprep.subr.mxu0 0.0
        %2488 = vmatpush1.msra.mxu0 %v2463
        %2489 = vmatprep.subr.mxu0 0.0
        %2490 = vmatpush1.msra.mxu0 %v2464
        %2491 = vmatprep.subr.mxu0 0.0
        %2492 = vmatpush1.msra.mxu0 %v2465
        %2493 = vmatprep.subr.mxu0 0.0
        %2494 = vmatpush1.msra.mxu0 0.0
        %2495 = vmatprep.subr.mxu0 0.0
        %2496 = vmatpush1.msra.mxu0 0.0
        %2497 = vmatprep.subr.mxu0 0.0
        %2498 = vmatpush1.msra.mxu0 0.0
        %2499 = vmatprep.subr.mxu0 0.0
        %2500 = vmatpush1.msra.mxu0 0.0
        %2501 = vmatprep.subr.mxu0 0.0
        %2502 = vmatpush1.msra.mxu0 0.0
        %2503 = vmatprep.subr.mxu0 0.0
        %2504 = vmatpush1.msra.mxu0 0.0
        %2505 = vmatprep.subr.mxu0 0.0
        %2506 = vmatpush1.msra.mxu0 0.0
        %2507 = vmatprep.subr.mxu0 0.0
        %2508 = vmatpush1.msra.mxu0 0.0
        %2509 = vmatprep.subr.mxu0 0.0
        %2510 = vmatpush1.msra.mxu0 0.0
        %2511 = vmatprep.subr.mxu0 0.0
        %2512 = vmatpush1.msra.mxu0 0.0
        %2513 = vmatprep.subr.mxu0 0.0
        %2514 = vmatpush1.msra.mxu0 0.0
        %2515 = vmatprep.subr.mxu0 0.0
        %2516 = vmatpush1.msra.mxu0 0.0
        %2517 = vmatprep.subr.mxu0 0.0
        %2518 = vmatpush1.msra.mxu0 0.0
        %2519 = vmatprep.subr.mxu0 0.0
        %2520 = vmatpush1.msra.mxu0 0.0
        %2521 = vmatprep.subr.mxu0 0.0
        %2522 = vmatpush1.msra.mxu0 0.0
        %2523 = vmatprep.subr.mxu0 0.0
        %2524 = vmatpush1.msra.mxu0 0.0
        %2525 = vmatprep.subr.mxu0 0.0
        %2526 = vmatpush1.msra.mxu0 0.0
        %2527 = vmatprep.subr.mxu0 0.0
        %2528 = vmatpush1.msra.mxu0 0.0
        %2529 = vmatprep.subr.mxu0 0.0
        %2530 = vmatpush1.msra.mxu0 0.0
        %2531 = vmatprep.subr.mxu0 0.0
        %2532 = vmatpush1.msra.mxu0 0.0
        %2533 = vmatprep.subr.mxu0 0.0
        %2534 = vmatpush1.msra.mxu0 0.0
        %2535 = vmatprep.subr.mxu0 0.0
        %2536 = vmatpush1.msra.mxu0 0.0
        %2537 = vmatprep.subr.mxu0 0.0
        %2538 = vmatpush1.msra.mxu0 0.0
        %2539 = vmatprep.subr.mxu0 0.0
        %2540 = vmatpush1.msra.mxu0 0.0
        %2541 = vmatprep.mubr.f32.mxu0 0.0
        %2542 = vmatmul.mubr.f32.gmra.mrb[0].mxu0 %v2475
        %v2543 = vpop.f32.mrb[0].mxu0
        %v2544 = vadd.f32 %v2471, %v2543
        %v2545 = vpop.f32.mrb[0].mxu0
        %2546 = vdwg.mxu0
        %v2547 = vmul.f32 %v2343, 0.5
        %v2548 = vadd.f32 %v2544, %v2547
        %2549 = vst.msk [vmem:[%s458] sm:$0xff] %vm466, %v2548
        %s2550 = sand.u32 %s335, 1
        %s2551 = scalar_lea.sflag [#allocation3], %s2550
        %s2552 = sand.u32 %s335, 1
        %s2553 = smul.addr %s2552, 8
        %s2554 = scalar_lea.vmem [#allocation2], %s2553
        // Predicated region
        $region77: #{tpu_custom_call.1} parent=75 // pred_check
          %p2555 = pneg %p345
        $region78: #{tpu_custom_call.1} parent=75 // pred_check_branch
          %2557 = sbr.rel (%p2555) target = $region80
        $region79: #{tpu_custom_call.1} parent=75 // pred_region
          %s2559 = ssub.s32 128, 128
          %2560 = vsyncadd %s2551, %s2559
          %s2561 = smul.addr %s28, 128
          %s2562 = scalar_lea.hbm %s14, %s2561
          %s2564 = sshll.u32 %s2554, 4
          %s2565 = int_to_ptr.vmem [resolvable:$true] %s2564
          %2567 = dma.vmem_to_hbm [thread:$0]  %s2565, 128, %s2562, %s2551
        $region80: #{tpu_custom_call.1} parent=75 // pred_fallthru
          _
      $region76: #{tpu_custom_call.1} parent=5 // pred_fallthru
        _
      %p2568 = scmp.le.s32.totalorder 2, %s23
      // Predicated region
      $region81: #{tpu_custom_call.1} parent=5 // pred_check
        %p2569 = pneg %p2568
      $region82: #{tpu_custom_call.1} parent=5 // pred_check_branch
        %2571 = sbr.rel (%p2569) target = $region84
      $region83: #{tpu_custom_call.1} parent=5 // pred_region
        %s2572 = ssub.s32 %s23, 2
        // Predicated region
        $region85: #{tpu_custom_call.1} parent=83 // pred_check
          %p2573 = pneg %p351
        $region86: #{tpu_custom_call.1} parent=83 // pred_check_branch
          %2575 = sbr.rel (%p2573) target = $region88
        $region87: #{tpu_custom_call.1} parent=83 // pred_region
          %s2576 = sand.u32 %s336, 1
          %s2577 = scalar_lea.sflag [#allocation3], %s2576
          %s2578 = sand.u32 %s336, 1
          %s2579 = smul.addr %s2578, 8
          %s2580 = scalar_lea.vmem [#allocation2], %s2579
          %2581 = dma.done %s2577, 128
        $region88: #{tpu_custom_call.1} parent=83 // pred_fallthru
          _
      $region84: #{tpu_custom_call.1} parent=5 // pred_fallthru
        _
    $region6: #{tpu_custom_call.1} parent=1 // loop_footer
      %s27 = sadd.s32 1, %s23
    $region7: #{tpu_custom_call.1} parent=1 // loop_footer_branch
      %22 = sbr.rel target = $region3
    $region8: #{tpu_custom_call.1} parent=1 // loop_exit
      _
    %2582 = vsyncpa [#allocation3], 1
    %s2583 = scalar_lea.sflag [#allocation3], 1
    %2584 = vsyncpa %s2583, 1

</llo_original>
